<compile_context>
chip_gen: v7x
topology: tpu7x:2x2x1
jax: 0.10.0
libtpu: 0.0.40
codegen_flags: <defaults>
</compile_context>

<pallas_src>
import functools
import math

import jax
import jax.numpy as jnp
from jax.experimental import pallas as pl
from jax.experimental.pallas import tpu as pltpu

HIDDEN = 16          # true hidden width of GCNConv(1, 16)
HIDDEN_PAD = 128     # lane-dense padded hidden width


# ---------------------------------------------------------------------------
# Kernel 1: H = relu(A @ (x * w1_row) + b1)      (layer 1, fused transform)
# grid = (rows of A / TM, cols of A / TK); K axis is the reduction.
# ---------------------------------------------------------------------------
def gcn_layer1_kernel(a_ref, x_ref, w1_ref, b1_ref, h_ref, acc_ref):
    k = pl.program_id(1)

    @pl.when(k == 0)
    def _():
        acc_ref[...] = jnp.zeros_like(acc_ref)

    # K=1 contraction as a VPU broadcast outer product (keeps the MXU free).
    xw = (x_ref[...] * w1_ref[...]).astype(jnp.bfloat16)            # [TK, 128]
    acc_ref[...] += jnp.dot(a_ref[...], xw,
                            preferred_element_type=jnp.float32)     # [TM, 128]

    @pl.when(k == pl.num_programs(1) - 1)
    def _():
        h_ref[...] = jnp.maximum(acc_ref[...] + b1_ref[...], 0.0).astype(
            h_ref.dtype)


# ---------------------------------------------------------------------------
# Kernel 2: AH = A @ H    (layer-2 aggregation; [16,1] projection in wrapper)
# ---------------------------------------------------------------------------
def gcn_agg_kernel(a_ref, h_ref, o_ref, acc_ref):
    k = pl.program_id(1)

    @pl.when(k == 0)
    def _():
        acc_ref[...] = jnp.zeros_like(acc_ref)

    acc_ref[...] += jnp.dot(a_ref[...], h_ref[...],
                            preferred_element_type=jnp.float32)

    @pl.when(k == pl.num_programs(1) - 1)
    def _():
        o_ref[...] = acc_ref[...]


# ---------------------------------------------------------------------------
# pallas_call wrappers
# ---------------------------------------------------------------------------
def _layer1(a_bf16, x_pad, w1_pad, b1_pad, *, tm, tk):
    n_pad = a_bf16.shape[0]
    grid = (n_pad // tm, n_pad // tk)
    return pl.pallas_call(
        gcn_layer1_kernel,
        out_shape=jax.ShapeDtypeStruct((n_pad, HIDDEN_PAD), jnp.bfloat16),
        grid_spec=pltpu.PrefetchScalarGridSpec(
            num_scalar_prefetch=0,
            grid=grid,
            in_specs=[
                pl.BlockSpec((tm, tk), lambda i, k: (i, k)),           # A tile
                pl.BlockSpec((tk, 1), lambda i, k: (k, 0)),            # x tile
                pl.BlockSpec((1, HIDDEN_PAD), lambda i, k: (0, 0)),    # w1 row
                pl.BlockSpec((1, HIDDEN_PAD), lambda i, k: (0, 0)),    # b1 row
            ],
            out_specs=pl.BlockSpec((tm, HIDDEN_PAD), lambda i, k: (i, 0)),
            scratch_shapes=[pltpu.VMEM((tm, HIDDEN_PAD), jnp.float32)],
        ),
        compiler_params=pltpu.CompilerParams(
            dimension_semantics=("parallel", "arbitrary")),
    )(a_bf16, x_pad, w1_pad, b1_pad)


def _layer2(a_bf16, h_bf16, *, tm, tk):
    n_pad = a_bf16.shape[0]
    grid = (n_pad // tm, n_pad // tk)
    return pl.pallas_call(
        gcn_agg_kernel,
        out_shape=jax.ShapeDtypeStruct((n_pad, HIDDEN_PAD), jnp.float32),
        grid_spec=pltpu.PrefetchScalarGridSpec(
            num_scalar_prefetch=0,
            grid=grid,
            in_specs=[
                pl.BlockSpec((tm, tk), lambda i, k: (i, k)),           # A tile
                pl.BlockSpec((tk, HIDDEN_PAD), lambda i, k: (k, 0)),   # H tile
            ],
            out_specs=pl.BlockSpec((tm, HIDDEN_PAD), lambda i, k: (i, 0)),
            scratch_shapes=[pltpu.VMEM((tm, HIDDEN_PAD), jnp.float32)],
        ),
        compiler_params=pltpu.CompilerParams(
            dimension_semantics=("parallel", "arbitrary")),
    )(a_bf16, h_bf16)


# ---------------------------------------------------------------------------
# Plain-JAX glue: GCN symmetric normalization (matches PyG gcn_norm defaults:
# add_self_loops=True, normalize=True, edge_weight=1).
# ---------------------------------------------------------------------------
def gcn_norm_dense(edge_index, num_nodes):
    row, col = edge_index[0], edge_index[1]               # source, target
    loop = jnp.arange(num_nodes, dtype=edge_index.dtype)
    row = jnp.concatenate([row, loop])                    # add self-loops
    col = jnp.concatenate([col, loop])
    ew = jnp.ones(row.shape[0], dtype=jnp.float32)
    deg = jnp.zeros((num_nodes,), jnp.float32).at[col].add(ew)
    dinv = jnp.where(deg > 0, 1.0 / jnp.sqrt(deg), 0.0)
    norm = dinv[row] * ew * dinv[col]
    # A_norm[target, source] so that out = A_norm @ (X W)
    return jnp.zeros((num_nodes, num_nodes), jnp.float32).at[col, row].add(norm)


@functools.partial(jax.jit, static_argnames=("tm", "tk"))
def gnn_forward(x, edge_index, w1, b1, w2, b2, *, tm=256, tk=256):
    n = x.shape[0]
    blk = math.lcm(tm, tk)
    n_pad = ((n + blk - 1) // blk) * blk
    pad = n_pad - n

    a = gcn_norm_dense(edge_index, n)                                 # f32 [n,n]
    # zero-padded rows/cols keep padded nodes isolated; bf16 for HBM bandwidth
    a_bf16 = jnp.pad(a, ((0, pad), (0, pad))).astype(jnp.bfloat16)
    x_pad = jnp.pad(x, ((0, pad), (0, 0)))                            # [Np, 1]

    w1_pad = jnp.pad(w1, ((0, 0), (0, HIDDEN_PAD - HIDDEN)))          # [1, 128]
    b1_pad = jnp.pad(b1, ((0, 0), (0, HIDDEN_PAD - HIDDEN)))          # [1, 128]
    w2_pad = jnp.pad(w2, ((0, HIDDEN_PAD - HIDDEN), (0, 0)))          # [128, 1]

    h = _layer1(a_bf16, x_pad, w1_pad, b1_pad, tm=tm, tk=tk)          # bf16 [Np,128]
    ah = _layer2(a_bf16, h, tm=tm, tk=tk)                             # f32  [Np,128]

    # Tiny [128,1] projection + b2 in XLA keeps the Pallas outputs lane-dense
    # (padded hidden columns / padded rows contribute exactly zero).
    out = ah @ w2_pad + b2                                            # [Np, 1]
    return out[:n]


def glorot(key, shape):
    fan_in, fan_out = shape[0], shape[1]
    limit = jnp.sqrt(6.0 / (fan_in + fan_out))
    return jax.random.uniform(key, shape, jnp.float32, -limit, limit)


# ---------------------------------------------------------------------------
if __name__ == "__main__":
    key = jax.random.PRNGKey(0)
    k_x, k_w1, k_w2 = jax.random.split(key, 3)

    N = 300  # small demo graph; padded to 512 -> 2x2 grid of 256x256 tiles

    # deterministic parameters (GCNConv(1,16), GCNConv(16,1); PyG inits bias=0)
    w1 = glorot(k_w1, (1, HIDDEN))
    b1 = jnp.zeros((1, HIDDEN), jnp.float32)
    w2 = glorot(k_w2, (HIDDEN, 1))
    b2 = jnp.zeros((1, 1), jnp.float32)

    # deterministic bidirectional ring graph
    src = jnp.arange(N, dtype=jnp.int32)
    dst = (src + 1) % N
    edge_index = jnp.stack(
        [jnp.concatenate([src, dst]), jnp.concatenate([dst, src])], axis=0
    )  # [2, 2N]

    # node features data.x: [N, 1]
    x = jax.random.normal(k_x, (N, 1), jnp.float32)

    out = gnn_forward(x, edge_index, w1, b1, w2, b2)
    jax.block_until_ready(out)

    # f32 dense reference (loose tolerance: adjacency/activations are bf16).
    a_f32 = gcn_norm_dense(edge_index, N)
    h_ref = jnp.maximum(a_f32 @ (x @ w1) + b1, 0.0)
    ref = a_f32 @ (h_ref @ w2) + b2
    err = float(jnp.max(jnp.abs(out - ref)))
    tol = 5e-2 * (1.0 + float(jnp.max(jnp.abs(ref))))

    assert out.shape == (N, 1) and out.dtype == jnp.float32
    assert err < tol, f"max abs error {err} exceeds tol {tol}"
    print("KERNEL_OK")
</pallas_src>

<mosaic_0001>
module attributes {stable_mosaic.version = 11 : i64} {
  func.func @gcn_layer1_kernel(%arg0: i32, %arg1: i32, %arg2: memref<256x256xbf16, #tpu.memory_space<vmem>>, %arg3: memref<256x1xf32, #tpu.memory_space<vmem>>, %arg4: memref<1x128xf32, #tpu.memory_space<vmem>>, %arg5: memref<1x128xf32, #tpu.memory_space<vmem>>, %arg6: memref<256x128xbf16, #tpu.memory_space<vmem>>, %arg7: memref<256x128xf32, #tpu.memory_space<vmem>>) attributes {dimension_semantics = [#tpu.dimension_semantics<parallel>, #tpu.dimension_semantics<arbitrary>], iteration_bounds = array<i64: 2, 2>, scalar_prefetch = 0 : i64, scratch_operands = 1 : i64, tpu.core_type = #tpu.core_type<tc>, window_params = [{transform_indices = @transform_0, window_bounds = array<i64: 256, 256>}, {transform_indices = @transform_1, window_bounds = array<i64: 256, 1>}, {pipeline_mode = #tpu.pipeline_mode<synchronous>, transform_indices = @transform_2, window_bounds = array<i64: 1, 128>}, {pipeline_mode = #tpu.pipeline_mode<synchronous>, transform_indices = @transform_3, window_bounds = array<i64: 1, 128>}, {transform_indices = @transform_4, window_bounds = array<i64: 256, 128>}]} {
    %c0_i32 = arith.constant 0 : i32
    %0 = arith.cmpi eq, %arg1, %c0_i32 : i32
    %1 = arith.extui %0 : i1 to i32
    %c0_i32_0 = arith.constant 0 : i32
    %2 = arith.cmpi ne, %1, %c0_i32_0 : i32
    scf.if %2 {
      %cst_11 = arith.constant 0.000000e+00 : f32
      %17 = vector.broadcast %cst_11 : f32 to vector<256x128xf32>
      %c0_12 = arith.constant 0 : index
      %c0_13 = arith.constant 0 : index
      %18 = vector.load %arg7[%c0_12, %c0_13] : memref<256x128xf32, #tpu.memory_space<vmem>>, vector<256x128xf32>
      tpu.vector_store %arg7[%c0_12, %c0_13], %17 {strides = array<i32>} : memref<256x128xf32, #tpu.memory_space<vmem>>, vector<256x128xf32>,
    } else {
    }
    %c0 = arith.constant 0 : index
    %c0_1 = arith.constant 0 : index
    %3 = vector.load %arg3[%c0, %c0_1] : memref<256x1xf32, #tpu.memory_space<vmem>>, vector<256x1xf32>
    %c0_2 = arith.constant 0 : index
    %c0_3 = arith.constant 0 : index
    %4 = vector.load %arg4[%c0_2, %c0_3] : memref<1x128xf32, #tpu.memory_space<vmem>>, vector<1x128xf32>
    %5 = vector.broadcast %3 : vector<256x1xf32> to vector<256x128xf32>
    %6 = vector.broadcast %4 : vector<1x128xf32> to vector<256x128xf32>
    %7 = arith.mulf %5, %6 : vector<256x128xf32>
    %8 = arith.truncf %7 : vector<256x128xf32> to vector<256x128xbf16>
    %c0_4 = arith.constant 0 : index
    %c0_5 = arith.constant 0 : index
    %9 = vector.load %arg7[%c0_4, %c0_5] : memref<256x128xf32, #tpu.memory_space<vmem>>, vector<256x128xf32>
    %c0_6 = arith.constant 0 : index
    %c0_7 = arith.constant 0 : index
    %10 = vector.load %arg2[%c0_6, %c0_7] : memref<256x256xbf16, #tpu.memory_space<vmem>>, vector<256x256xbf16>
    %cst = arith.constant dense<0.000000e+00> : vector<256x128xf32>
    %11 = tpu.matmul %10, %8, %cst {dimension_numbers = #tpu.dot_dimension_numbers<[1], [0], [0], [1], [0, 0, 1, 1], [], []>} : vector<256x256xbf16>, vector<256x128xbf16>, vector<256x128xf32> -> vector<256x128xf32>
    %12 = arith.addf %9, %11 : vector<256x128xf32>
    %c0_8 = arith.constant 0 : index
    %c0_9 = arith.constant 0 : index
    %13 = vector.load %arg7[%c0_8, %c0_9] : memref<256x128xf32, #tpu.memory_space<vmem>>, vector<256x128xf32>
    tpu.vector_store %arg7[%c0_8, %c0_9], %12 {strides = array<i32>} : memref<256x128xf32, #tpu.memory_space<vmem>>, vector<256x128xf32>,
    %c1_i32 = arith.constant 1 : i32
    %14 = arith.cmpi eq, %arg1, %c1_i32 : i32
    %15 = arith.extui %14 : i1 to i32
    %c0_i32_10 = arith.constant 0 : i32
    %16 = arith.cmpi ne, %15, %c0_i32_10 : i32
    scf.if %16 {
      %c0_11 = arith.constant 0 : index
      %c0_12 = arith.constant 0 : index
      %17 = vector.load %arg7[%c0_11, %c0_12] : memref<256x128xf32, #tpu.memory_space<vmem>>, vector<256x128xf32>
      %c0_13 = arith.constant 0 : index
      %c0_14 = arith.constant 0 : index
      %18 = vector.load %arg5[%c0_13, %c0_14] : memref<1x128xf32, #tpu.memory_space<vmem>>, vector<1x128xf32>
      %19 = vector.broadcast %18 : vector<1x128xf32> to vector<256x128xf32>
      %20 = arith.addf %17, %19 : vector<256x128xf32>
      %cst_15 = arith.constant 0.000000e+00 : f32
      %21 = vector.broadcast %cst_15 : f32 to vector<256x128xf32>
      %22 = arith.maximumf %20, %21 : vector<256x128xf32>
      %23 = arith.truncf %22 : vector<256x128xf32> to vector<256x128xbf16>
      %c0_16 = arith.constant 0 : index
      %c0_17 = arith.constant 0 : index
      %24 = vector.load %arg6[%c0_16, %c0_17] : memref<256x128xbf16, #tpu.memory_space<vmem>>, vector<256x128xbf16>
      tpu.vector_store %arg6[%c0_16, %c0_17], %23 {strides = array<i32>} : memref<256x128xbf16, #tpu.memory_space<vmem>>, vector<256x128xbf16>,
    } else {
    }
    return
  }
  func.func @transform_0(%arg0: i32, %arg1: i32) -> (i32, i32) {
    %c0_i32 = arith.constant 0 : i32
    return %arg0, %arg1 : i32, i32
  }
  func.func @transform_1(%arg0: i32, %arg1: i32) -> (i32, i32) {
    %c0_i32 = arith.constant 0 : i32
    %c0_i32_0 = arith.constant 0 : i32
    return %arg1, %c0_i32 : i32, i32
  }
  func.func @transform_2(%arg0: i32, %arg1: i32) -> (i32, i32) {
    %c0_i32 = arith.constant 0 : i32
    %c0_i32_0 = arith.constant 0 : i32
    %c0_i32_1 = arith.constant 0 : i32
    return %c0_i32, %c0_i32_0 : i32, i32
  }
  func.func @transform_3(%arg0: i32, %arg1: i32) -> (i32, i32) {
    %c0_i32 = arith.constant 0 : i32
    %c0_i32_0 = arith.constant 0 : i32
    %c0_i32_1 = arith.constant 0 : i32
    return %c0_i32, %c0_i32_0 : i32, i32
  }
  func.func @transform_4(%arg0: i32, %arg1: i32) -> (i32, i32) {
    %c0_i32 = arith.constant 0 : i32
    %c0_i32_0 = arith.constant 0 : i32
    return %arg0, %c0_i32 : i32, i32
  }
}

module attributes {stable_mosaic.version = 11 : i64} {
  func.func @gcn_agg_kernel(%arg0: i32, %arg1: i32, %arg2: memref<256x256xbf16, #tpu.memory_space<vmem>>, %arg3: memref<256x128xbf16, #tpu.memory_space<vmem>>, %arg4: memref<256x128xf32, #tpu.memory_space<vmem>>, %arg5: memref<256x128xf32, #tpu.memory_space<vmem>>) attributes {dimension_semantics = [#tpu.dimension_semantics<parallel>, #tpu.dimension_semantics<arbitrary>], iteration_bounds = array<i64: 2, 2>, scalar_prefetch = 0 : i64, scratch_operands = 1 : i64, tpu.core_type = #tpu.core_type<tc>, window_params = [{transform_indices = @transform_0, window_bounds = array<i64: 256, 256>}, {transform_indices = @transform_1, window_bounds = array<i64: 256, 128>}, {transform_indices = @transform_2, window_bounds = array<i64: 256, 128>}]} {
    %c0_i32 = arith.constant 0 : i32
    %0 = arith.cmpi eq, %arg1, %c0_i32 : i32
    %1 = arith.extui %0 : i1 to i32
    %c0_i32_0 = arith.constant 0 : i32
    %2 = arith.cmpi ne, %1, %c0_i32_0 : i32
    scf.if %2 {
      %cst_9 = arith.constant 0.000000e+00 : f32
      %12 = vector.broadcast %cst_9 : f32 to vector<256x128xf32>
      %c0_10 = arith.constant 0 : index
      %c0_11 = arith.constant 0 : index
      %13 = vector.load %arg5[%c0_10, %c0_11] : memref<256x128xf32, #tpu.memory_space<vmem>>, vector<256x128xf32>
      tpu.vector_store %arg5[%c0_10, %c0_11], %12 {strides = array<i32>} : memref<256x128xf32, #tpu.memory_space<vmem>>, vector<256x128xf32>,
    } else {
    }
    %c0 = arith.constant 0 : index
    %c0_1 = arith.constant 0 : index
    %3 = vector.load %arg5[%c0, %c0_1] : memref<256x128xf32, #tpu.memory_space<vmem>>, vector<256x128xf32>
    %c0_2 = arith.constant 0 : index
    %c0_3 = arith.constant 0 : index
    %4 = vector.load %arg2[%c0_2, %c0_3] : memref<256x256xbf16, #tpu.memory_space<vmem>>, vector<256x256xbf16>
    %c0_4 = arith.constant 0 : index
    %c0_5 = arith.constant 0 : index
    %5 = vector.load %arg3[%c0_4, %c0_5] : memref<256x128xbf16, #tpu.memory_space<vmem>>, vector<256x128xbf16>
    %cst = arith.constant dense<0.000000e+00> : vector<256x128xf32>
    %6 = tpu.matmul %4, %5, %cst {dimension_numbers = #tpu.dot_dimension_numbers<[1], [0], [0], [1], [0, 0, 1, 1], [], []>} : vector<256x256xbf16>, vector<256x128xbf16>, vector<256x128xf32> -> vector<256x128xf32>
    %7 = arith.addf %3, %6 : vector<256x128xf32>
    %c0_6 = arith.constant 0 : index
    %c0_7 = arith.constant 0 : index
    %8 = vector.load %arg5[%c0_6, %c0_7] : memref<256x128xf32, #tpu.memory_space<vmem>>, vector<256x128xf32>
    tpu.vector_store %arg5[%c0_6, %c0_7], %7 {strides = array<i32>} : memref<256x128xf32, #tpu.memory_space<vmem>>, vector<256x128xf32>,
    %c1_i32 = arith.constant 1 : i32
    %9 = arith.cmpi eq, %arg1, %c1_i32 : i32
    %10 = arith.extui %9 : i1 to i32
    %c0_i32_8 = arith.constant 0 : i32
    %11 = arith.cmpi ne, %10, %c0_i32_8 : i32
    scf.if %11 {
      %c0_9 = arith.constant 0 : index
      %c0_10 = arith.constant 0 : index
      %12 = vector.load %arg5[%c0_9, %c0_10] : memref<256x128xf32, #tpu.memory_space<vmem>>, vector<256x128xf32>
      %c0_11 = arith.constant 0 : index
      %c0_12 = arith.constant 0 : index
      %13 = vector.load %arg4[%c0_11, %c0_12] : memref<256x128xf32, #tpu.memory_space<vmem>>, vector<256x128xf32>
      tpu.vector_store %arg4[%c0_11, %c0_12], %12 {strides = array<i32>} : memref<256x128xf32, #tpu.memory_space<vmem>>, vector<256x128xf32>,
    } else {
    }
    return
  }
  func.func @transform_0(%arg0: i32, %arg1: i32) -> (i32, i32) {
    %c0_i32 = arith.constant 0 : i32
    return %arg0, %arg1 : i32, i32
  }
  func.func @transform_1(%arg0: i32, %arg1: i32) -> (i32, i32) {
    %c0_i32 = arith.constant 0 : i32
    %c0_i32_0 = arith.constant 0 : i32
    return %arg1, %c0_i32 : i32, i32
  }
  func.func @transform_2(%arg0: i32, %arg1: i32) -> (i32, i32) {
    %c0_i32 = arith.constant 0 : i32
    %c0_i32_0 = arith.constant 0 : i32
    return %arg0, %c0_i32 : i32, i32
  }
}

</mosaic_0001>

<llo_original>
// kernel: mul.1
$region0: #{mul.1}
  #allocation0 [shape = 's32[1]{0}', space=sflag, size = 0x4, scoped, tag = 'scoped memory for mul.1']
  %s0 = inlined_call_operand.vmem [shape: f32[900], index: 0, kind: input, shape index: {}]
  %s1 = inlined_call_operand.vmem [shape: f32[900], index: 1, kind: input, shape index: {}]
  %s2 = inlined_call_operand.vmem [shape: f32[900], index: 2, kind: output, shape index: {}]
  %v3 = vld [vmem:[%s0] sm:$0xff]
  %v4 = vld [vmem:[%s1] sm:$0xff]
  %5 = xla_tuple %v3, %v4
  %6 = xla_tuple %5
  %v7 = vmul.f32 %v3, %v4
  %8 = xla_tuple %v7
  %9 = vst [vmem:[%s2] sm:$0xff] %v7

// kernel: gnn_forward.3
$region0: #{gnn_forward.3}
  #allocation0 [shape = 'u32[]', space=smem, size = 0x4, offset = 0x4, fixed_abs, tag = 'smem constant byte address 0x4 - core index']
  #allocation1 [shape = 'u32[144,128]{1,0:T(1,128)}', space=vmem, size = 0x12000, scoped, tag = 'internal scratch']
  #allocation2 [shape = 'f32[256,128]{1,0:T(8,128)}', space=vmem, size = 0x20000, scoped, tag = 'scratch operand']
  %s0 = inlined_call_operand.vmem [shape: bf16[512,512], index: 0, kind: input, shape index: {}]
  %s1 = inlined_call_operand.vmem [shape: bf16[512,128], index: 1, kind: input, shape index: {}]
  %s2 = inlined_call_operand.vmem [shape: f32[512,128], index: 2, kind: output, shape index: {}]
  %s3 = sld [smem:[#allocation0]]
  $region87: #{gnn_forward.3} parent=0
    _
  %s5 = ssub.s32 1, %s3
  %s6 = scalar_select 0, %s5, %s3
  $region1: #{gnn_forward.3} parent=0
    #allocation3 [shape = 'u8[262144]{0}', space=vmem, size = 0x40000, scoped, tag = 'input window, operand 0']
    loop: start=0, step=1, limit=6
    $region2: #{gnn_forward.3} parent=1 // loop_pre_header
      _
    $region3: #{gnn_forward.3} parent=1 // loop_header
      %s8 = sphi 0, %s12
      %p9 = scmp.ge.s32.totalorder %s8, 6
      %s15 = sphi 0, %s27
      %s16 = sphi 0, %s23
      %s17 = sphi 0, %s15
      %s18 = sphi 0, %s16
      %s19 = sphi 0, %s17
      %s20 = sphi 0, %s18
      %s32 = sphi 0, %s34
      %s35 = sphi 0, %s32
      %s36 = sphi 0, %s35
      %s52 = sphi 0, %s36
      %s58 = sphi 0, %s60
      %s61 = sphi 0, %s58
      %s62 = sphi 0, %s61
      %s78 = sphi 0, %s62
      %s84 = sphi 0, %s86
      %s87 = sphi 0, %s84
      %s88 = sphi 0, %s87
      %s104 = sphi 0, %s88
    $region4: #{gnn_forward.3} parent=1 // loop_header_branch
      %11 = sbr.rel (%p9) target = $region8
    $region5: #{gnn_forward.3} parent=1 // loop_body
      %s13 = ssub.s32 %s8, 1
      %s14 = ssub.s32 %s8, 2
      %s21 = sadd.s32 1, %s16
      %p22 = scmp.ge.s32.totalorder %s21, 2
      %s23 = scalar_select %p22, 0, %s21
      %s24 = sadd.s32 1, %s15
      %s25 = scalar_select %p22, %s24, %s15
      %p26 = scmp.ge.s32.totalorder %s25, 2
      %s27 = scalar_select %p26, 0, %s25
      %s28 = ssub.s32 %s15, %s27
      %s29 = ssub.s32 %s16, %s23
      %s30 = sor.u32 %s28, %s29
      %p31 = scmp.eq.s32.totalorder %s30, 0
      %s33 = sadd.s32 %s32, 1
      %s34 = scalar_select %p31, %s32, %s33
      %p37 = pneg %p31
      %p38 = scmp.eq.s32.totalorder %s8, 3
      %p39 = por %p37, %p38
      %p40 = scmp.ne.s32.totalorder %s32, %s35
      %p41 = scmp.eq.s32.totalorder %s8, 0
      %p42 = por %p40, %p41
      %p43 = scmp.ne.s32.totalorder %s32, %s35
      %p44 = scmp.eq.s32.totalorder %s13, 3
      %p45 = por %p43, %p44
      %p46 = scmp.ne.s32.totalorder %s35, %s36
      %p47 = scmp.eq.s32.totalorder %s13, 0
      %p48 = por %p46, %p47
      %p49 = scmp.ne.s32.totalorder %s35, %s36
      %p50 = scmp.eq.s32.totalorder %s14, 3
      %p51 = por %p49, %p50
      %p53 = scmp.ne.s32.totalorder %s36, %s52
      %p54 = scmp.eq.s32.totalorder %s14, 0
      %p55 = por %p53, %p54
      %s56 = ssub.s32 %s16, %s23
      %p57 = scmp.eq.s32.totalorder %s56, 0
      %s59 = sadd.s32 %s58, 1
      %s60 = scalar_select %p57, %s58, %s59
      %p63 = pneg %p57
      %p64 = scmp.eq.s32.totalorder %s8, 3
      %p65 = por %p63, %p64
      %p66 = scmp.ne.s32.totalorder %s58, %s61
      %p67 = scmp.eq.s32.totalorder %s8, 0
      %p68 = por %p66, %p67
      %p69 = scmp.ne.s32.totalorder %s58, %s61
      %p70 = scmp.eq.s32.totalorder %s13, 3
      %p71 = por %p69, %p70
      %p72 = scmp.ne.s32.totalorder %s61, %s62
      %p73 = scmp.eq.s32.totalorder %s13, 0
      %p74 = por %p72, %p73
      %p75 = scmp.ne.s32.totalorder %s61, %s62
      %p76 = scmp.eq.s32.totalorder %s14, 3
      %p77 = por %p75, %p76
      %p79 = scmp.ne.s32.totalorder %s62, %s78
      %p80 = scmp.eq.s32.totalorder %s14, 0
      %p81 = por %p79, %p80
      %s82 = ssub.s32 %s15, %s27
      %p83 = scmp.eq.s32.totalorder %s82, 0
      %s85 = sadd.s32 %s84, 1
      %s86 = scalar_select %p83, %s84, %s85
      %p89 = pneg %p83
      %p90 = scmp.eq.s32.totalorder %s8, 3
      %p91 = por %p89, %p90
      %p92 = scmp.ne.s32.totalorder %s84, %s87
      %p93 = scmp.eq.s32.totalorder %s8, 0
      %p94 = por %p92, %p93
      %p95 = scmp.ne.s32.totalorder %s84, %s87
      %p96 = scmp.eq.s32.totalorder %s13, 3
      %p97 = por %p95, %p96
      %p98 = scmp.ne.s32.totalorder %s87, %s88
      %p99 = scmp.eq.s32.totalorder %s13, 0
      %p100 = por %p98, %p99
      %p101 = scmp.ne.s32.totalorder %s87, %s88
      %p102 = scmp.eq.s32.totalorder %s14, 3
      %p103 = por %p101, %p102
      %p105 = scmp.ne.s32.totalorder %s88, %s104
      %p106 = scmp.eq.s32.totalorder %s14, 0
      %p107 = por %p105, %p106
      %p108 = scmp.le.s32.totalorder 1, %s8
      %p109 = scmp.lt.s32.totalorder %s8, 5
      %p110 = pnand %p108, %p109
      %p111 = pneg %p110
      // Predicated region
      $region9: #{gnn_forward.3} parent=5 // pred_check
        _
      $region10: #{gnn_forward.3} parent=5 // pred_check_branch
        %113 = sbr.rel (%p110) target = $region12
      $region11: #{gnn_forward.3} parent=5 // pred_region
        %s114 = ssub.s32 %s8, 1
      $region12: #{gnn_forward.3} parent=5 // pred_fallthru
        _
      %p115 = scmp.lt.s32.totalorder %s8, 4
      // Predicated region
      $region13: #{gnn_forward.3} parent=5 // pred_check
        %p116 = pneg %p115
      $region14: #{gnn_forward.3} parent=5 // pred_check_branch
        %118 = sbr.rel (%p116) target = $region16
      $region15: #{gnn_forward.3} parent=5 // pred_region
        // Predicated region
        $region17: #{gnn_forward.3} parent=15 // pred_check
          %p119 = pneg %p42
        $region18: #{gnn_forward.3} parent=15 // pred_check_branch
          %121 = sbr.rel (%p119) target = $region20
        $region19: #{gnn_forward.3} parent=15 // pred_region
          %s122 = sand.u32 %s32, 1
          %s123 = sand.u32 %s32, 1
          %s124 = smul.addr %s123, 256
          %s125 = scalar_lea.vmem [#allocation3], %s124
          %s126 = smul.u32 32, %s15
          %s127 = smul.u32 2, %s16
          %s128 = smul.addr %s126, 4
          %s129 = sadd.s32 %s127, %s128
          %s130 = smul.addr %s129, 4
          %s131 = scalar_lea.vmem %s0, %s130
          // Predicated region
          $region21: #{gnn_forward.3} parent=19 // pred_check
            _
          $region22: #{gnn_forward.3} parent=19 // pred_check_branch
            %133 = sbr.rel (0) target = $region24
          $region23: #{gnn_forward.3} parent=19 // pred_region
            // Predicated region
            $region25: #{gnn_forward.3} parent=23 // pred_check
              _
            $region26: #{gnn_forward.3} parent=23 // pred_check_branch
              %135 = sbr.rel (0) target = $region28
            $region27: #{gnn_forward.3} parent=23 // pred_region
              // Predicated region
              $region40: #{gnn_forward.3} parent=27 // pred_check
                _
              $region41: #{gnn_forward.3} parent=27 // pred_check_branch
                %212 = sbr.rel (0) target = $region43
              $region42: #{gnn_forward.3} parent=27 // pred_region
                loop: start=0, step=1, limit=1
                $region44: #{gnn_forward.3} parent=42 // loop_pre_header
                  _
                $region45: #{gnn_forward.3} parent=42 // loop_header
                  %s214 = sphi 0, %s218
                  %p215 = scmp.ge.s32.totalorder %s214, 1
                  %s219 = sphi %s131, %s131
                  %s220 = sphi %s125, %s125
                $region46: #{gnn_forward.3} parent=42 // loop_header_branch
                  %217 = sbr.rel (%p215) target = $region50
                $region47: #{gnn_forward.3} parent=42 // loop_body
                  %v221 = vld [vmem:[%s219] sm:$0xff]
                  %222 = vst [vmem:[%s220] sm:$0xff] %v221
                  %v223 = vld [vmem:[%s219 + $0x10] sm:$0xff]
                  %224 = vst [vmem:[%s220 + $0x8] sm:$0xff] %v223
                  %v225 = vld [vmem:[%s219 + $0x20] sm:$0xff]
                  %226 = vst [vmem:[%s220 + $0x10] sm:$0xff] %v225
                  %v227 = vld [vmem:[%s219 + $0x30] sm:$0xff]
                  %228 = vst [vmem:[%s220 + $0x18] sm:$0xff] %v227
                  %v229 = vld [vmem:[%s219 + $0x40] sm:$0xff]
                  %230 = vst [vmem:[%s220 + $0x20] sm:$0xff] %v229
                  %v231 = vld [vmem:[%s219 + $0x50] sm:$0xff]
                  %232 = vst [vmem:[%s220 + $0x28] sm:$0xff] %v231
                  %v233 = vld [vmem:[%s219 + $0x60] sm:$0xff]
                  %234 = vst [vmem:[%s220 + $0x30] sm:$0xff] %v233
                  %v235 = vld [vmem:[%s219 + $0x70] sm:$0xff]
                  %236 = vst [vmem:[%s220 + $0x38] sm:$0xff] %v235
                  %v237 = vld [vmem:[%s219 + $0x80] sm:$0xff]
                  %238 = vst [vmem:[%s220 + $0x40] sm:$0xff] %v237
                  %v239 = vld [vmem:[%s219 + $0x90] sm:$0xff]
                  %240 = vst [vmem:[%s220 + $0x48] sm:$0xff] %v239
                  %v241 = vld [vmem:[%s219 + $0xa0] sm:$0xff]
                  %242 = vst [vmem:[%s220 + $0x50] sm:$0xff] %v241
                  %v243 = vld [vmem:[%s219 + $0xb0] sm:$0xff]
                  %244 = vst [vmem:[%s220 + $0x58] sm:$0xff] %v243
                  %v245 = vld [vmem:[%s219 + $0xc0] sm:$0xff]
                  %246 = vst [vmem:[%s220 + $0x60] sm:$0xff] %v245
                  %v247 = vld [vmem:[%s219 + $0xd0] sm:$0xff]
                  %248 = vst [vmem:[%s220 + $0x68] sm:$0xff] %v247
                  %v249 = vld [vmem:[%s219 + $0xe0] sm:$0xff]
                  %250 = vst [vmem:[%s220 + $0x70] sm:$0xff] %v249
                  %v251 = vld [vmem:[%s219 + $0xf0] sm:$0xff]
                  %252 = vst [vmem:[%s220 + $0x78] sm:$0xff] %v251
                  %v253 = vld [vmem:[%s219 + $0x100] sm:$0xff]
                  %254 = vst [vmem:[%s220 + $0x80] sm:$0xff] %v253
                  %v255 = vld [vmem:[%s219 + $0x110] sm:$0xff]
                  %256 = vst [vmem:[%s220 + $0x88] sm:$0xff] %v255
                  %v257 = vld [vmem:[%s219 + $0x120] sm:$0xff]
                  %258 = vst [vmem:[%s220 + $0x90] sm:$0xff] %v257
                  %v259 = vld [vmem:[%s219 + $0x130] sm:$0xff]
                  %260 = vst [vmem:[%s220 + $0x98] sm:$0xff] %v259
                  %v261 = vld [vmem:[%s219 + $0x140] sm:$0xff]
                  %262 = vst [vmem:[%s220 + $0xa0] sm:$0xff] %v261
                  %v263 = vld [vmem:[%s219 + $0x150] sm:$0xff]
                  %264 = vst [vmem:[%s220 + $0xa8] sm:$0xff] %v263
                  %v265 = vld [vmem:[%s219 + $0x160] sm:$0xff]
                  %266 = vst [vmem:[%s220 + $0xb0] sm:$0xff] %v265
                  %v267 = vld [vmem:[%s219 + $0x170] sm:$0xff]
                  %268 = vst [vmem:[%s220 + $0xb8] sm:$0xff] %v267
                  %v269 = vld [vmem:[%s219 + $0x180] sm:$0xff]
                  %270 = vst [vmem:[%s220 + $0xc0] sm:$0xff] %v269
                  %v271 = vld [vmem:[%s219 + $0x190] sm:$0xff]
                  %272 = vst [vmem:[%s220 + $0xc8] sm:$0xff] %v271
                  %v273 = vld [vmem:[%s219 + $0x1a0] sm:$0xff]
                  %274 = vst [vmem:[%s220 + $0xd0] sm:$0xff] %v273
                  %v275 = vld [vmem:[%s219 + $0x1b0] sm:$0xff]
                  %276 = vst [vmem:[%s220 + $0xd8] sm:$0xff] %v275
                  %v277 = vld [vmem:[%s219 + $0x1c0] sm:$0xff]
                  %278 = vst [vmem:[%s220 + $0xe0] sm:$0xff] %v277
                  %v279 = vld [vmem:[%s219 + $0x1d0] sm:$0xff]
                  %280 = vst [vmem:[%s220 + $0xe8] sm:$0xff] %v279
                  %v281 = vld [vmem:[%s219 + $0x1e0] sm:$0xff]
                  %282 = vst [vmem:[%s220 + $0xf0] sm:$0xff] %v281
                  %v283 = vld [vmem:[%s219 + $0x1f0] sm:$0xff]
                  %284 = vst [vmem:[%s220 + $0xf8] sm:$0xff] %v283
                $region48: #{gnn_forward.3} parent=42 // loop_footer
                  %s218 = sadd.s32 1, %s214
                $region49: #{gnn_forward.3} parent=42 // loop_footer_branch
                  %213 = sbr.rel target = $region45
                $region50: #{gnn_forward.3} parent=42 // loop_exit
                  _
              $region43: #{gnn_forward.3} parent=27 // pred_fallthru
                _
              // Predicated region
              $region51: #{gnn_forward.3} parent=27 // pred_check
                _
              $region52: #{gnn_forward.3} parent=27 // pred_check_branch
                %286 = sbr.rel target = $region54
              $region53: #{gnn_forward.3} parent=27 // pred_region
                _
              $region54: #{gnn_forward.3} parent=27 // pred_fallthru
                _
            $region28: #{gnn_forward.3} parent=23 // pred_fallthru
              _
            // Predicated region
            $region29: #{gnn_forward.3} parent=23 // pred_check
              _
            $region30: #{gnn_forward.3} parent=23 // pred_check_branch
              %137 = sbr.rel target = $region32
            $region31: #{gnn_forward.3} parent=23 // pred_region
              loop: start=0, step=1, limit=1
              $region33: #{gnn_forward.3} parent=31 // loop_pre_header
                _
              $region34: #{gnn_forward.3} parent=31 // loop_header
                %s140 = sphi 0, %s144
                %p141 = scmp.ge.s32.totalorder %s140, 1
                %s145 = sphi %s131, %s131
                %s146 = sphi %s125, %s125
              $region35: #{gnn_forward.3} parent=31 // loop_header_branch
                %143 = sbr.rel (%p141) target = $region39
              $region36: #{gnn_forward.3} parent=31 // loop_body
                %v147 = vld [vmem:[%s145] sm:$0xff]
                %148 = vst [vmem:[%s146] sm:$0xff] %v147
                %v149 = vld [vmem:[%s145 + $0x10] sm:$0xff]
                %150 = vst [vmem:[%s146 + $0x8] sm:$0xff] %v149
                %v151 = vld [vmem:[%s145 + $0x20] sm:$0xff]
                %152 = vst [vmem:[%s146 + $0x10] sm:$0xff] %v151
                %v153 = vld [vmem:[%s145 + $0x30] sm:$0xff]
                %154 = vst [vmem:[%s146 + $0x18] sm:$0xff] %v153
                %v155 = vld [vmem:[%s145 + $0x40] sm:$0xff]
                %156 = vst [vmem:[%s146 + $0x20] sm:$0xff] %v155
                %v157 = vld [vmem:[%s145 + $0x50] sm:$0xff]
                %158 = vst [vmem:[%s146 + $0x28] sm:$0xff] %v157
                %v159 = vld [vmem:[%s145 + $0x60] sm:$0xff]
                %160 = vst [vmem:[%s146 + $0x30] sm:$0xff] %v159
                %v161 = vld [vmem:[%s145 + $0x70] sm:$0xff]
                %162 = vst [vmem:[%s146 + $0x38] sm:$0xff] %v161
                %v163 = vld [vmem:[%s145 + $0x80] sm:$0xff]
                %164 = vst [vmem:[%s146 + $0x40] sm:$0xff] %v163
                %v165 = vld [vmem:[%s145 + $0x90] sm:$0xff]
                %166 = vst [vmem:[%s146 + $0x48] sm:$0xff] %v165
                %v167 = vld [vmem:[%s145 + $0xa0] sm:$0xff]
                %168 = vst [vmem:[%s146 + $0x50] sm:$0xff] %v167
                %v169 = vld [vmem:[%s145 + $0xb0] sm:$0xff]
                %170 = vst [vmem:[%s146 + $0x58] sm:$0xff] %v169
                %v171 = vld [vmem:[%s145 + $0xc0] sm:$0xff]
                %172 = vst [vmem:[%s146 + $0x60] sm:$0xff] %v171
                %v173 = vld [vmem:[%s145 + $0xd0] sm:$0xff]
                %174 = vst [vmem:[%s146 + $0x68] sm:$0xff] %v173
                %v175 = vld [vmem:[%s145 + $0xe0] sm:$0xff]
                %176 = vst [vmem:[%s146 + $0x70] sm:$0xff] %v175
                %v177 = vld [vmem:[%s145 + $0xf0] sm:$0xff]
                %178 = vst [vmem:[%s146 + $0x78] sm:$0xff] %v177
                %v179 = vld [vmem:[%s145 + $0x100] sm:$0xff]
                %180 = vst [vmem:[%s146 + $0x80] sm:$0xff] %v179
                %v181 = vld [vmem:[%s145 + $0x110] sm:$0xff]
                %182 = vst [vmem:[%s146 + $0x88] sm:$0xff] %v181
                %v183 = vld [vmem:[%s145 + $0x120] sm:$0xff]
                %184 = vst [vmem:[%s146 + $0x90] sm:$0xff] %v183
                %v185 = vld [vmem:[%s145 + $0x130] sm:$0xff]
                %186 = vst [vmem:[%s146 + $0x98] sm:$0xff] %v185
                %v187 = vld [vmem:[%s145 + $0x140] sm:$0xff]
                %188 = vst [vmem:[%s146 + $0xa0] sm:$0xff] %v187
                %v189 = vld [vmem:[%s145 + $0x150] sm:$0xff]
                %190 = vst [vmem:[%s146 + $0xa8] sm:$0xff] %v189
                %v191 = vld [vmem:[%s145 + $0x160] sm:$0xff]
                %192 = vst [vmem:[%s146 + $0xb0] sm:$0xff] %v191
                %v193 = vld [vmem:[%s145 + $0x170] sm:$0xff]
                %194 = vst [vmem:[%s146 + $0xb8] sm:$0xff] %v193
                %v195 = vld [vmem:[%s145 + $0x180] sm:$0xff]
                %196 = vst [vmem:[%s146 + $0xc0] sm:$0xff] %v195
                %v197 = vld [vmem:[%s145 + $0x190] sm:$0xff]
                %198 = vst [vmem:[%s146 + $0xc8] sm:$0xff] %v197
                %v199 = vld [vmem:[%s145 + $0x1a0] sm:$0xff]
                %200 = vst [vmem:[%s146 + $0xd0] sm:$0xff] %v199
                %v201 = vld [vmem:[%s145 + $0x1b0] sm:$0xff]
                %202 = vst [vmem:[%s146 + $0xd8] sm:$0xff] %v201
                %v203 = vld [vmem:[%s145 + $0x1c0] sm:$0xff]
                %204 = vst [vmem:[%s146 + $0xe0] sm:$0xff] %v203
                %v205 = vld [vmem:[%s145 + $0x1d0] sm:$0xff]
                %206 = vst [vmem:[%s146 + $0xe8] sm:$0xff] %v205
                %v207 = vld [vmem:[%s145 + $0x1e0] sm:$0xff]
                %208 = vst [vmem:[%s146 + $0xf0] sm:$0xff] %v207
                %v209 = vld [vmem:[%s145 + $0x1f0] sm:$0xff]
                %210 = vst [vmem:[%s146 + $0xf8] sm:$0xff] %v209
              $region37: #{gnn_forward.3} parent=31 // loop_footer
                %s144 = sadd.s32 1, %s140
              $region38: #{gnn_forward.3} parent=31 // loop_footer_branch
                %139 = sbr.rel target = $region34
              $region39: #{gnn_forward.3} parent=31 // loop_exit
                _
            $region32: #{gnn_forward.3} parent=23 // pred_fallthru
              _
          $region24: #{gnn_forward.3} parent=19 // pred_fallthru
            _
          %287 = vnop
        $region20: #{gnn_forward.3} parent=15 // pred_fallthru
          _
        // Predicated region
        $region55: #{gnn_forward.3} parent=15 // pred_check
          %p288 = pneg %p68
        $region56: #{gnn_forward.3} parent=15 // pred_check_branch
          %290 = sbr.rel (%p288) target = $region58
        $region57: #{gnn_forward.3} parent=15 // pred_region
          %s291 = smul.u32 32, %s16
          %p292 = scmp.lt.s32.totalorder %s291, 63
          %s293 = scalar_select %p292, %s291, 63
          %s294 = smul.addr %s293, 4
          %s295 = scalar_lea.vmem %s1, %s294
          %s296 = smul.u32 32, %s16
        $region58: #{gnn_forward.3} parent=15 // pred_fallthru
          _
      $region16: #{gnn_forward.3} parent=5 // pred_fallthru
        _
      %p297 = scmp.le.s32.totalorder 1, %s8
      %p298 = scmp.lt.s32.totalorder %s8, 5
      %p299 = pnand %p297, %p298
      %p300 = pneg %p299
      // Predicated region
      $region59: #{gnn_forward.3} parent=5 // pred_check
        _
      $region60: #{gnn_forward.3} parent=5 // pred_check_branch
        %302 = sbr.rel (%p299) target = $region62
      $region61: #{gnn_forward.3} parent=5 // pred_region
        %s303 = ssub.s32 %s8, 1
        %s304 = sand.u32 %s35, 1
        %s305 = sand.u32 %s35, 1
        %s306 = smul.addr %s305, 256
        %s307 = scalar_lea.vmem [#allocation3], %s306
        // Predicated region
        $region63: #{gnn_forward.3} parent=61 // pred_check
          %p308 = pneg %p48
        $region64: #{gnn_forward.3} parent=61 // pred_check_branch
          %310 = sbr.rel (%p308) target = $region66
        $region65: #{gnn_forward.3} parent=61 // pred_region
          _
        $region66: #{gnn_forward.3} parent=61 // pred_fallthru
          _
        %s311 = sand.u32 %s35, 1
        %s312 = sand.u32 %s35, 1
        %s313 = smul.addr %s312, 256
        %s314 = scalar_lea.vmem [#allocation3], %s313
        %p315 = pneg %p48
        %p316 = pneg %p45
        %s317 = smul.u32 32, %s18
        %p318 = scmp.lt.s32.totalorder %s317, 63
        %s319 = scalar_select %p318, %s317, 63
        %s320 = smul.addr %s319, 4
        %s321 = scalar_lea.vmem %s1, %s320
        %p322 = pneg %p74
        %p323 = pneg %p71
        %p324 = pneg %p100
        %p325 = pneg %p97
        %s326 = smul.u32 32, %s17
        %p327 = scmp.lt.s32.totalorder %s326, 63
        %s328 = scalar_select %p327, %s326, 63
        %s329 = smul.addr %s328, 8
        %s330 = scalar_lea.vmem %s2, %s329
        %s331 = smul.u32 32, %s17
        %s332 = smul.u32 2, %s18
        %s333 = smul.u32 32, %s18
        %p334 = scmp.lt.s32.totalorder %s333, 63
        %s335 = scalar_select %p334, %s333, 63
        %s336 = smul.addr %s335, 4
        %s337 = scalar_lea.vmem %s1, %s336
        %s338 = smul.u32 32, %s18
        %s339 = smul.u32 32, %s17
        %p340 = scmp.lt.s32.totalorder %s339, 63
        %s341 = scalar_select %p340, %s339, 63
        %s342 = smul.addr %s341, 8
        %s343 = scalar_lea.vmem %s2, %s342
        %s344 = smul.u32 32, %s17
        %p346 = scmp.eq.s32.totalorder %s18, 0
        // Predicated region
        $region67: #{gnn_forward.3} parent=61 // pred_check
          %p347 = pneg %p346
        $region68: #{gnn_forward.3} parent=61 // pred_check_branch
          %349 = sbr.rel (%p347) target = $region70
        $region69: #{gnn_forward.3} parent=61 // pred_region
          %350 = vst [vmem:[#allocation2] sm:$0xff] 0.0
          %351 = vst [vmem:[#allocation2 + $0x8] sm:$0xff] 0.0
          %352 = vst [vmem:[#allocation2 + $0x10] sm:$0xff] 0.0
          %353 = vst [vmem:[#allocation2 + $0x18] sm:$0xff] 0.0
          %354 = vst [vmem:[#allocation2 + $0x20] sm:$0xff] 0.0
          %355 = vst [vmem:[#allocation2 + $0x28] sm:$0xff] 0.0
          %356 = vst [vmem:[#allocation2 + $0x30] sm:$0xff] 0.0
          %357 = vst [vmem:[#allocation2 + $0x38] sm:$0xff] 0.0
          %358 = vst [vmem:[#allocation2 + $0x40] sm:$0xff] 0.0
          %359 = vst [vmem:[#allocation2 + $0x48] sm:$0xff] 0.0
          %360 = vst [vmem:[#allocation2 + $0x50] sm:$0xff] 0.0
          %361 = vst [vmem:[#allocation2 + $0x58] sm:$0xff] 0.0
          %362 = vst [vmem:[#allocation2 + $0x60] sm:$0xff] 0.0
          %363 = vst [vmem:[#allocation2 + $0x68] sm:$0xff] 0.0
          %364 = vst [vmem:[#allocation2 + $0x70] sm:$0xff] 0.0
          %365 = vst [vmem:[#allocation2 + $0x78] sm:$0xff] 0.0
          %366 = vst [vmem:[#allocation2 + $0x80] sm:$0xff] 0.0
          %367 = vst [vmem:[#allocation2 + $0x88] sm:$0xff] 0.0
          %368 = vst [vmem:[#allocation2 + $0x90] sm:$0xff] 0.0
          %369 = vst [vmem:[#allocation2 + $0x98] sm:$0xff] 0.0
          %370 = vst [vmem:[#allocation2 + $0xa0] sm:$0xff] 0.0
          %371 = vst [vmem:[#allocation2 + $0xa8] sm:$0xff] 0.0
          %372 = vst [vmem:[#allocation2 + $0xb0] sm:$0xff] 0.0
          %373 = vst [vmem:[#allocation2 + $0xb8] sm:$0xff] 0.0
          %374 = vst [vmem:[#allocation2 + $0xc0] sm:$0xff] 0.0
          %375 = vst [vmem:[#allocation2 + $0xc8] sm:$0xff] 0.0
          %376 = vst [vmem:[#allocation2 + $0xd0] sm:$0xff] 0.0
          %377 = vst [vmem:[#allocation2 + $0xd8] sm:$0xff] 0.0
          %378 = vst [vmem:[#allocation2 + $0xe0] sm:$0xff] 0.0
          %379 = vst [vmem:[#allocation2 + $0xe8] sm:$0xff] 0.0
          %380 = vst [vmem:[#allocation2 + $0xf0] sm:$0xff] 0.0
          %381 = vst [vmem:[#allocation2 + $0xf8] sm:$0xff] 0.0
        $region70: #{gnn_forward.3} parent=61 // pred_fallthru
          _
        %v382 = vld [vmem:[#allocation2] sm:$0xff]
        %v383 = vld [vmem:[#allocation2 + $0x8] sm:$0xff]
        %v384 = vld [vmem:[#allocation2 + $0x10] sm:$0xff]
        %v385 = vld [vmem:[#allocation2 + $0x18] sm:$0xff]
        %v386 = vld [vmem:[#allocation2 + $0x20] sm:$0xff]
        %v387 = vld [vmem:[#allocation2 + $0x28] sm:$0xff]
        %v388 = vld [vmem:[#allocation2 + $0x30] sm:$0xff]
        %v389 = vld [vmem:[#allocation2 + $0x38] sm:$0xff]
        %v390 = vld [vmem:[#allocation2 + $0x40] sm:$0xff]
        %v391 = vld [vmem:[#allocation2 + $0x48] sm:$0xff]
        %v392 = vld [vmem:[#allocation2 + $0x50] sm:$0xff]
        %v393 = vld [vmem:[#allocation2 + $0x58] sm:$0xff]
        %v394 = vld [vmem:[#allocation2 + $0x60] sm:$0xff]
        %v395 = vld [vmem:[#allocation2 + $0x68] sm:$0xff]
        %v396 = vld [vmem:[#allocation2 + $0x70] sm:$0xff]
        %v397 = vld [vmem:[#allocation2 + $0x78] sm:$0xff]
        %v398 = vld [vmem:[#allocation2 + $0x80] sm:$0xff]
        %v399 = vld [vmem:[#allocation2 + $0x88] sm:$0xff]
        %v400 = vld [vmem:[#allocation2 + $0x90] sm:$0xff]
        %v401 = vld [vmem:[#allocation2 + $0x98] sm:$0xff]
        %v402 = vld [vmem:[#allocation2 + $0xa0] sm:$0xff]
        %v403 = vld [vmem:[#allocation2 + $0xa8] sm:$0xff]
        %v404 = vld [vmem:[#allocation2 + $0xb0] sm:$0xff]
        %v405 = vld [vmem:[#allocation2 + $0xb8] sm:$0xff]
        %v406 = vld [vmem:[#allocation2 + $0xc0] sm:$0xff]
        %v407 = vld [vmem:[#allocation2 + $0xc8] sm:$0xff]
        %v408 = vld [vmem:[#allocation2 + $0xd0] sm:$0xff]
        %v409 = vld [vmem:[#allocation2 + $0xd8] sm:$0xff]
        %v410 = vld [vmem:[#allocation2 + $0xe0] sm:$0xff]
        %v411 = vld [vmem:[#allocation2 + $0xe8] sm:$0xff]
        %v412 = vld [vmem:[#allocation2 + $0xf0] sm:$0xff]
        %v413 = vld [vmem:[#allocation2 + $0xf8] sm:$0xff]
        %v414 = vld [vmem:[%s307] sm:$0xff]
        %v415 = vld [vmem:[%s307 + $0x8] sm:$0xff]
        %v416 = vld [vmem:[%s307 + $0x10] sm:$0xff]
        %v417 = vld [vmem:[%s307 + $0x18] sm:$0xff]
        %v418 = vld [vmem:[%s307 + $0x20] sm:$0xff]
        %v419 = vld [vmem:[%s307 + $0x28] sm:$0xff]
        %v420 = vld [vmem:[%s307 + $0x30] sm:$0xff]
        %v421 = vld [vmem:[%s307 + $0x38] sm:$0xff]
        %v422 = vld [vmem:[%s307 + $0x40] sm:$0xff]
        %v423 = vld [vmem:[%s307 + $0x48] sm:$0xff]
        %v424 = vld [vmem:[%s307 + $0x50] sm:$0xff]
        %v425 = vld [vmem:[%s307 + $0x58] sm:$0xff]
        %v426 = vld [vmem:[%s307 + $0x60] sm:$0xff]
        %v427 = vld [vmem:[%s307 + $0x68] sm:$0xff]
        %v428 = vld [vmem:[%s307 + $0x70] sm:$0xff]
        %v429 = vld [vmem:[%s307 + $0x78] sm:$0xff]
        %v430 = vld [vmem:[%s307 + $0x80] sm:$0xff]
        %v431 = vld [vmem:[%s307 + $0x88] sm:$0xff]
        %v432 = vld [vmem:[%s307 + $0x90] sm:$0xff]
        %v433 = vld [vmem:[%s307 + $0x98] sm:$0xff]
        %v434 = vld [vmem:[%s307 + $0xa0] sm:$0xff]
        %v435 = vld [vmem:[%s307 + $0xa8] sm:$0xff]
        %v436 = vld [vmem:[%s307 + $0xb0] sm:$0xff]
        %v437 = vld [vmem:[%s307 + $0xb8] sm:$0xff]
        %v438 = vld [vmem:[%s307 + $0xc0] sm:$0xff]
        %v439 = vld [vmem:[%s307 + $0xc8] sm:$0xff]
        %v440 = vld [vmem:[%s307 + $0xd0] sm:$0xff]
        %v441 = vld [vmem:[%s307 + $0xd8] sm:$0xff]
        %v442 = vld [vmem:[%s307 + $0xe0] sm:$0xff]
        %v443 = vld [vmem:[%s307 + $0xe8] sm:$0xff]
        %v444 = vld [vmem:[%s307 + $0xf0] sm:$0xff]
        %v445 = vld [vmem:[%s307 + $0xf8] sm:$0xff]
        %v446 = vld [vmem:[%s337] sm:$0xf]
        %v447 = vld [vmem:[%s337 + $0x4] sm:$0xf]
        %v448 = vld [vmem:[%s337 + $0x8] sm:$0xf]
        %v449 = vld [vmem:[%s337 + $0xc] sm:$0xf]
        %v450 = vld [vmem:[%s337 + $0x10] sm:$0xf]
        %v451 = vld [vmem:[%s337 + $0x14] sm:$0xf]
        %v452 = vld [vmem:[%s337 + $0x18] sm:$0xf]
        %v453 = vld [vmem:[%s337 + $0x1c] sm:$0xf]
        %v454 = vld [vmem:[%s337 + $0x20] sm:$0xf]
        %v455 = vld [vmem:[%s337 + $0x24] sm:$0xf]
        %v456 = vld [vmem:[%s337 + $0x28] sm:$0xf]
        %v457 = vld [vmem:[%s337 + $0x2c] sm:$0xf]
        %v458 = vld [vmem:[%s337 + $0x30] sm:$0xf]
        %v459 = vld [vmem:[%s337 + $0x34] sm:$0xf]
        %v460 = vld [vmem:[%s337 + $0x38] sm:$0xf]
        %v461 = vld [vmem:[%s337 + $0x3c] sm:$0xf]
        %v462 = vld [vmem:[%s337 + $0x40] sm:$0xf]
        %v463 = vld [vmem:[%s337 + $0x44] sm:$0xf]
        %v464 = vld [vmem:[%s337 + $0x48] sm:$0xf]
        %v465 = vld [vmem:[%s337 + $0x4c] sm:$0xf]
        %v466 = vld [vmem:[%s337 + $0x50] sm:$0xf]
        %v467 = vld [vmem:[%s337 + $0x54] sm:$0xf]
        %v468 = vld [vmem:[%s337 + $0x58] sm:$0xf]
        %v469 = vld [vmem:[%s337 + $0x5c] sm:$0xf]
        %v470 = vld [vmem:[%s337 + $0x60] sm:$0xf]
        %v471 = vld [vmem:[%s337 + $0x64] sm:$0xf]
        %v472 = vld [vmem:[%s337 + $0x68] sm:$0xf]
        %v473 = vld [vmem:[%s337 + $0x6c] sm:$0xf]
        %v474 = vld [vmem:[%s337 + $0x70] sm:$0xf]
        %v475 = vld [vmem:[%s337 + $0x74] sm:$0xf]
        %v476 = vld [vmem:[%s337 + $0x78] sm:$0xf]
        %v477 = vld [vmem:[%s337 + $0x7c] sm:$0xf]
        %v510 = vunpack.c.l.b16 %v414
        %v511 = vunpack.c.h.b16 %v414
        %v512 = vunpack.c.l.b16 %v415
        %v513 = vunpack.c.h.b16 %v415
        %v514 = vunpack.c.l.b16 %v416
        %v515 = vunpack.c.h.b16 %v416
        %v516 = vunpack.c.l.b16 %v417
        %v517 = vunpack.c.h.b16 %v417
        %v518 = vunpack.c.l.b16 %v418
        %v519 = vunpack.c.h.b16 %v418
        %v520 = vunpack.c.l.b16 %v419
        %v521 = vunpack.c.h.b16 %v419
        %v522 = vunpack.c.l.b16 %v420
        %v523 = vunpack.c.h.b16 %v420
        %v524 = vunpack.c.l.b16 %v421
        %v525 = vunpack.c.h.b16 %v421
        %v526 = vunpack.c.l.b16 %v422
        %v527 = vunpack.c.h.b16 %v422
        %v528 = vunpack.c.l.b16 %v423
        %v529 = vunpack.c.h.b16 %v423
        %v530 = vunpack.c.l.b16 %v424
        %v531 = vunpack.c.h.b16 %v424
        %v532 = vunpack.c.l.b16 %v425
        %v533 = vunpack.c.h.b16 %v425
        %v534 = vunpack.c.l.b16 %v426
        %v535 = vunpack.c.h.b16 %v426
        %v536 = vunpack.c.l.b16 %v427
        %v537 = vunpack.c.h.b16 %v427
        %v538 = vunpack.c.l.b16 %v428
        %v539 = vunpack.c.h.b16 %v428
        %v540 = vunpack.c.l.b16 %v429
        %v541 = vunpack.c.h.b16 %v429
        %v542 = vunpack.c.l.b16 %v430
        %v543 = vunpack.c.h.b16 %v430
        %v544 = vunpack.c.l.b16 %v431
        %v545 = vunpack.c.h.b16 %v431
        %v546 = vunpack.c.l.b16 %v432
        %v547 = vunpack.c.h.b16 %v432
        %v548 = vunpack.c.l.b16 %v433
        %v549 = vunpack.c.h.b16 %v433
        %v550 = vunpack.c.l.b16 %v434
        %v551 = vunpack.c.h.b16 %v434
        %v552 = vunpack.c.l.b16 %v435
        %v553 = vunpack.c.h.b16 %v435
        %v554 = vunpack.c.l.b16 %v436
        %v555 = vunpack.c.h.b16 %v436
        %v556 = vunpack.c.l.b16 %v437
        %v557 = vunpack.c.h.b16 %v437
        %v558 = vunpack.c.l.b16 %v438
        %v559 = vunpack.c.h.b16 %v438
        %v560 = vunpack.c.l.b16 %v439
        %v561 = vunpack.c.h.b16 %v439
        %v562 = vunpack.c.l.b16 %v440
        %v563 = vunpack.c.h.b16 %v440
        %v564 = vunpack.c.l.b16 %v441
        %v565 = vunpack.c.h.b16 %v441
        %v566 = vunpack.c.l.b16 %v442
        %v567 = vunpack.c.h.b16 %v442
        %v568 = vunpack.c.l.b16 %v443
        %v569 = vunpack.c.h.b16 %v443
        %v570 = vunpack.c.l.b16 %v444
        %v571 = vunpack.c.h.b16 %v444
        %v572 = vunpack.c.l.b16 %v445
        %v573 = vunpack.c.h.b16 %v445
        %v574 = vpack.c.b16 %v512, %v510
        %v575 = vpack.c.b16 %v513, %v511
        %v576 = vpack.c.b16 %v516, %v514
        %v577 = vpack.c.b16 %v517, %v515
        %v578 = vpack.c.b16 %v520, %v518
        %v579 = vpack.c.b16 %v521, %v519
        %v580 = vpack.c.b16 %v524, %v522
        %v581 = vpack.c.b16 %v525, %v523
        %v582 = vpack.c.b16 %v528, %v526
        %v583 = vpack.c.b16 %v529, %v527
        %v584 = vpack.c.b16 %v532, %v530
        %v585 = vpack.c.b16 %v533, %v531
        %v586 = vpack.c.b16 %v536, %v534
        %v587 = vpack.c.b16 %v537, %v535
        %v588 = vpack.c.b16 %v540, %v538
        %v589 = vpack.c.b16 %v541, %v539
        %v590 = vpack.c.b16 %v544, %v542
        %v591 = vpack.c.b16 %v545, %v543
        %v592 = vpack.c.b16 %v548, %v546
        %v593 = vpack.c.b16 %v549, %v547
        %v594 = vpack.c.b16 %v552, %v550
        %v595 = vpack.c.b16 %v553, %v551
        %v596 = vpack.c.b16 %v556, %v554
        %v597 = vpack.c.b16 %v557, %v555
        %v598 = vpack.c.b16 %v560, %v558
        %v599 = vpack.c.b16 %v561, %v559
        %v600 = vpack.c.b16 %v564, %v562
        %v601 = vpack.c.b16 %v565, %v563
        %v602 = vpack.c.b16 %v568, %v566
        %v603 = vpack.c.b16 %v569, %v567
        %v604 = vpack.c.b16 %v572, %v570
        %v605 = vpack.c.b16 %v573, %v571
        %v670 = vunpack.c.l.b16 %v446
        %v671 = vunpack.c.l.b16 %v447
        %v672 = vunpack.c.l.b16 %v448
        %v673 = vunpack.c.l.b16 %v449
        %v674 = vunpack.c.l.b16 %v450
        %v675 = vunpack.c.l.b16 %v451
        %v676 = vunpack.c.l.b16 %v452
        %v677 = vunpack.c.l.b16 %v453
        %v678 = vunpack.c.l.b16 %v454
        %v679 = vunpack.c.l.b16 %v455
        %v680 = vunpack.c.l.b16 %v456
        %v681 = vunpack.c.l.b16 %v457
        %v682 = vunpack.c.l.b16 %v458
        %v683 = vunpack.c.l.b16 %v459
        %v684 = vunpack.c.l.b16 %v460
        %v685 = vunpack.c.l.b16 %v461
        %v686 = vunpack.c.l.b16 %v462
        %v687 = vunpack.c.l.b16 %v463
        %v688 = vunpack.c.l.b16 %v464
        %v689 = vunpack.c.l.b16 %v465
        %v690 = vunpack.c.l.b16 %v466
        %v691 = vunpack.c.l.b16 %v467
        %v692 = vunpack.c.l.b16 %v468
        %v693 = vunpack.c.l.b16 %v469
        %v694 = vunpack.c.l.b16 %v470
        %v695 = vunpack.c.l.b16 %v471
        %v696 = vunpack.c.l.b16 %v472
        %v697 = vunpack.c.l.b16 %v473
        %v698 = vunpack.c.l.b16 %v474
        %v699 = vunpack.c.l.b16 %v475
        %v700 = vunpack.c.l.b16 %v476
        %v701 = vunpack.c.l.b16 %v477
        %v702 = vpack.c.b16 %v671, %v670
        %v703 = vpack.c.b16 %v673, %v672
        %v704 = vpack.c.b16 %v675, %v674
        %v705 = vpack.c.b16 %v677, %v676
        %v706 = vpack.c.b16 %v679, %v678
        %v707 = vpack.c.b16 %v681, %v680
        %v708 = vpack.c.b16 %v683, %v682
        %v709 = vpack.c.b16 %v685, %v684
        %v710 = vpack.c.b16 %v687, %v686
        %v711 = vpack.c.b16 %v689, %v688
        %v712 = vpack.c.b16 %v691, %v690
        %v713 = vpack.c.b16 %v693, %v692
        %v714 = vpack.c.b16 %v695, %v694
        %v715 = vpack.c.b16 %v697, %v696
        %v716 = vpack.c.b16 %v699, %v698
        %v717 = vpack.c.b16 %v701, %v700
        %734 = vmatprep.subr.bf16.mxu0 0
        %735 = vmatpush1.bf16.msra.mxu0 %v702
        %736 = vmatprep.subr.bf16.mxu0 0
        %737 = vmatpush1.bf16.msra.mxu0 %v703
        %738 = vmatprep.subr.bf16.mxu0 0
        %739 = vmatpush1.bf16.msra.mxu0 %v704
        %740 = vmatprep.subr.bf16.mxu0 0
        %741 = vmatpush1.bf16.msra.mxu0 %v705
        %742 = vmatprep.subr.bf16.mxu0 0
        %743 = vmatpush1.bf16.msra.mxu0 %v706
        %744 = vmatprep.subr.bf16.mxu0 0
        %745 = vmatpush1.bf16.msra.mxu0 %v707
        %746 = vmatprep.subr.bf16.mxu0 0
        %747 = vmatpush1.bf16.msra.mxu0 %v708
        %748 = vmatprep.subr.bf16.mxu0 0
        %749 = vmatpush1.bf16.msra.mxu0 %v709
        %750 = vmatprep.subr.bf16.mxu0 0
        %751 = vmatpush1.bf16.msra.mxu0 %v710
        %752 = vmatprep.subr.bf16.mxu0 0
        %753 = vmatpush1.bf16.msra.mxu0 %v711
        %754 = vmatprep.subr.bf16.mxu0 0
        %755 = vmatpush1.bf16.msra.mxu0 %v712
        %756 = vmatprep.subr.bf16.mxu0 0
        %757 = vmatpush1.bf16.msra.mxu0 %v713
        %758 = vmatprep.subr.bf16.mxu0 0
        %759 = vmatpush1.bf16.msra.mxu0 %v714
        %760 = vmatprep.subr.bf16.mxu0 0
        %761 = vmatpush1.bf16.msra.mxu0 %v715
        %762 = vmatprep.subr.bf16.mxu0 0
        %763 = vmatpush1.bf16.msra.mxu0 %v716
        %764 = vmatprep.subr.bf16.mxu0 0
        %765 = vmatpush1.bf16.msra.mxu0 %v717
        %766 = vmatprep.mubr.bf16.mxu0 %v575
        %767 = vmatmul.mubr.bf16.gmra.mrb[0].mxu0 %v574
        %v768 = vpop.f32.mrb[0].mxu0
        %v769 = vadd.f32 0.0, %v768
        %v770 = vpop.f32.mrb[0].mxu0
        %v771 = vpop.f32.mrb[0].mxu0
        %v772 = vadd.f32 0.0, %v771
        %v773 = vpop.f32.mrb[0].mxu0
        %774 = vmatprep.mubr.bf16.mxu0 %v577
        %775 = vmatmul.mubr.bf16.gmra.mrb[0].mxu0 %v576
        %v776 = vpop.f32.mrb[0].mxu0
        %v777 = vadd.f32 0.0, %v776
        %v778 = vpop.f32.mrb[0].mxu0
        %v779 = vpop.f32.mrb[0].mxu0
        %v780 = vadd.f32 0.0, %v779
        %v781 = vpop.f32.mrb[0].mxu0
        %782 = vmatprep.mubr.bf16.mxu0 %v579
        %783 = vmatmul.mubr.bf16.gmra.mrb[0].mxu0 %v578
        %v784 = vpop.f32.mrb[0].mxu0
        %v785 = vadd.f32 0.0, %v784
        %v786 = vpop.f32.mrb[0].mxu0
        %v787 = vpop.f32.mrb[0].mxu0
        %v788 = vadd.f32 0.0, %v787
        %v789 = vpop.f32.mrb[0].mxu0
        %790 = vmatprep.mubr.bf16.mxu0 %v581
        %791 = vmatmul.mubr.bf16.gmra.mrb[0].mxu0 %v580
        %v792 = vpop.f32.mrb[0].mxu0
        %v793 = vadd.f32 0.0, %v792
        %v794 = vpop.f32.mrb[0].mxu0
        %v795 = vpop.f32.mrb[0].mxu0
        %v796 = vadd.f32 0.0, %v795
        %v797 = vpop.f32.mrb[0].mxu0
        %798 = vmatprep.mubr.bf16.mxu0 %v583
        %799 = vmatmul.mubr.bf16.gmra.mrb[0].mxu0 %v582
        %v800 = vpop.f32.mrb[0].mxu0
        %v801 = vadd.f32 0.0, %v800
        %v802 = vpop.f32.mrb[0].mxu0
        %v803 = vpop.f32.mrb[0].mxu0
        %v804 = vadd.f32 0.0, %v803
        %v805 = vpop.f32.mrb[0].mxu0
        %806 = vmatprep.mubr.bf16.mxu0 %v585
        %807 = vmatmul.mubr.bf16.gmra.mrb[0].mxu0 %v584
        %v808 = vpop.f32.mrb[0].mxu0
        %v809 = vadd.f32 0.0, %v808
        %v810 = vpop.f32.mrb[0].mxu0
        %v811 = vpop.f32.mrb[0].mxu0
        %v812 = vadd.f32 0.0, %v811
        %v813 = vpop.f32.mrb[0].mxu0
        %814 = vmatprep.mubr.bf16.mxu0 %v587
        %815 = vmatmul.mubr.bf16.gmra.mrb[0].mxu0 %v586
        %v816 = vpop.f32.mrb[0].mxu0
        %v817 = vadd.f32 0.0, %v816
        %v818 = vpop.f32.mrb[0].mxu0
        %v819 = vpop.f32.mrb[0].mxu0
        %v820 = vadd.f32 0.0, %v819
        %v821 = vpop.f32.mrb[0].mxu0
        %822 = vmatprep.mubr.bf16.mxu0 %v589
        %823 = vmatmul.mubr.bf16.gmra.mrb[0].mxu0 %v588
        %v824 = vpop.f32.mrb[0].mxu0
        %v825 = vadd.f32 0.0, %v824
        %v826 = vpop.f32.mrb[0].mxu0
        %v827 = vpop.f32.mrb[0].mxu0
        %v828 = vadd.f32 0.0, %v827
        %v829 = vpop.f32.mrb[0].mxu0
        %830 = vmatprep.mubr.bf16.mxu0 %v591
        %831 = vmatmul.mubr.bf16.gmra.mrb[0].mxu0 %v590
        %v832 = vpop.f32.mrb[0].mxu0
        %v833 = vadd.f32 0.0, %v832
        %v834 = vpop.f32.mrb[0].mxu0
        %v835 = vpop.f32.mrb[0].mxu0
        %v836 = vadd.f32 0.0, %v835
        %v837 = vpop.f32.mrb[0].mxu0
        %838 = vmatprep.mubr.bf16.mxu0 %v593
        %839 = vmatmul.mubr.bf16.gmra.mrb[0].mxu0 %v592
        %v840 = vpop.f32.mrb[0].mxu0
        %v841 = vadd.f32 0.0, %v840
        %v842 = vpop.f32.mrb[0].mxu0
        %v843 = vpop.f32.mrb[0].mxu0
        %v844 = vadd.f32 0.0, %v843
        %v845 = vpop.f32.mrb[0].mxu0
        %846 = vmatprep.mubr.bf16.mxu0 %v595
        %847 = vmatmul.mubr.bf16.gmra.mrb[0].mxu0 %v594
        %v848 = vpop.f32.mrb[0].mxu0
        %v849 = vadd.f32 0.0, %v848
        %v850 = vpop.f32.mrb[0].mxu0
        %v851 = vpop.f32.mrb[0].mxu0
        %v852 = vadd.f32 0.0, %v851
        %v853 = vpop.f32.mrb[0].mxu0
        %854 = vmatprep.mubr.bf16.mxu0 %v597
        %855 = vmatmul.mubr.bf16.gmra.mrb[0].mxu0 %v596
        %v856 = vpop.f32.mrb[0].mxu0
        %v857 = vadd.f32 0.0, %v856
        %v858 = vpop.f32.mrb[0].mxu0
        %v859 = vpop.f32.mrb[0].mxu0
        %v860 = vadd.f32 0.0, %v859
        %v861 = vpop.f32.mrb[0].mxu0
        %862 = vmatprep.mubr.bf16.mxu0 %v599
        %863 = vmatmul.mubr.bf16.gmra.mrb[0].mxu0 %v598
        %v864 = vpop.f32.mrb[0].mxu0
        %v865 = vadd.f32 0.0, %v864
        %v866 = vpop.f32.mrb[0].mxu0
        %v867 = vpop.f32.mrb[0].mxu0
        %v868 = vadd.f32 0.0, %v867
        %v869 = vpop.f32.mrb[0].mxu0
        %870 = vmatprep.mubr.bf16.mxu0 %v601
        %871 = vmatmul.mubr.bf16.gmra.mrb[0].mxu0 %v600
        %v872 = vpop.f32.mrb[0].mxu0
        %v873 = vadd.f32 0.0, %v872
        %v874 = vpop.f32.mrb[0].mxu0
        %v875 = vpop.f32.mrb[0].mxu0
        %v876 = vadd.f32 0.0, %v875
        %v877 = vpop.f32.mrb[0].mxu0
        %878 = vmatprep.mubr.bf16.mxu0 %v603
        %879 = vmatmul.mubr.bf16.gmra.mrb[0].mxu0 %v602
        %v880 = vpop.f32.mrb[0].mxu0
        %v881 = vadd.f32 0.0, %v880
        %v882 = vpop.f32.mrb[0].mxu0
        %v883 = vpop.f32.mrb[0].mxu0
        %v884 = vadd.f32 0.0, %v883
        %v885 = vpop.f32.mrb[0].mxu0
        %886 = vmatprep.mubr.bf16.mxu0 %v605
        %887 = vmatmul.mubr.bf16.gmra.mrb[0].mxu0 %v604
        %v888 = vpop.f32.mrb[0].mxu0
        %v889 = vadd.f32 0.0, %v888
        %v890 = vpop.f32.mrb[0].mxu0
        %v891 = vpop.f32.mrb[0].mxu0
        %v892 = vadd.f32 0.0, %v891
        %v893 = vpop.f32.mrb[0].mxu0
        %894 = vdwg.mxu0
        %v895 = vadd.f32 %v382, %v769
        %v896 = vadd.f32 %v383, %v772
        %v897 = vadd.f32 %v384, %v777
        %v898 = vadd.f32 %v385, %v780
        %v899 = vadd.f32 %v386, %v785
        %v900 = vadd.f32 %v387, %v788
        %v901 = vadd.f32 %v388, %v793
        %v902 = vadd.f32 %v389, %v796
        %v903 = vadd.f32 %v390, %v801
        %v904 = vadd.f32 %v391, %v804
        %v905 = vadd.f32 %v392, %v809
        %v906 = vadd.f32 %v393, %v812
        %v907 = vadd.f32 %v394, %v817
        %v908 = vadd.f32 %v395, %v820
        %v909 = vadd.f32 %v396, %v825
        %v910 = vadd.f32 %v397, %v828
        %v911 = vadd.f32 %v398, %v833
        %v912 = vadd.f32 %v399, %v836
        %v913 = vadd.f32 %v400, %v841
        %v914 = vadd.f32 %v401, %v844
        %v915 = vadd.f32 %v402, %v849
        %v916 = vadd.f32 %v403, %v852
        %v917 = vadd.f32 %v404, %v857
        %v918 = vadd.f32 %v405, %v860
        %v919 = vadd.f32 %v406, %v865
        %v920 = vadd.f32 %v407, %v868
        %v921 = vadd.f32 %v408, %v873
        %v922 = vadd.f32 %v409, %v876
        %v923 = vadd.f32 %v410, %v881
        %v924 = vadd.f32 %v411, %v884
        %v925 = vadd.f32 %v412, %v889
        %v926 = vadd.f32 %v413, %v892
        %927 = vst [vmem:[#allocation2] sm:$0xff] %v895
        %928 = vst [vmem:[#allocation2 + $0x8] sm:$0xff] %v896
        %929 = vst [vmem:[#allocation2 + $0x10] sm:$0xff] %v897
        %930 = vst [vmem:[#allocation2 + $0x18] sm:$0xff] %v898
        %931 = vst [vmem:[#allocation2 + $0x20] sm:$0xff] %v899
        %932 = vst [vmem:[#allocation2 + $0x28] sm:$0xff] %v900
        %933 = vst [vmem:[#allocation2 + $0x30] sm:$0xff] %v901
        %934 = vst [vmem:[#allocation2 + $0x38] sm:$0xff] %v902
        %935 = vst [vmem:[#allocation2 + $0x40] sm:$0xff] %v903
        %936 = vst [vmem:[#allocation2 + $0x48] sm:$0xff] %v904
        %937 = vst [vmem:[#allocation2 + $0x50] sm:$0xff] %v905
        %938 = vst [vmem:[#allocation2 + $0x58] sm:$0xff] %v906
        %939 = vst [vmem:[#allocation2 + $0x60] sm:$0xff] %v907
        %940 = vst [vmem:[#allocation2 + $0x68] sm:$0xff] %v908
        %941 = vst [vmem:[#allocation2 + $0x70] sm:$0xff] %v909
        %942 = vst [vmem:[#allocation2 + $0x78] sm:$0xff] %v910
        %943 = vst [vmem:[#allocation2 + $0x80] sm:$0xff] %v911
        %944 = vst [vmem:[#allocation2 + $0x88] sm:$0xff] %v912
        %945 = vst [vmem:[#allocation2 + $0x90] sm:$0xff] %v913
        %946 = vst [vmem:[#allocation2 + $0x98] sm:$0xff] %v914
        %947 = vst [vmem:[#allocation2 + $0xa0] sm:$0xff] %v915
        %948 = vst [vmem:[#allocation2 + $0xa8] sm:$0xff] %v916
        %949 = vst [vmem:[#allocation2 + $0xb0] sm:$0xff] %v917
        %950 = vst [vmem:[#allocation2 + $0xb8] sm:$0xff] %v918
        %951 = vst [vmem:[#allocation2 + $0xc0] sm:$0xff] %v919
        %952 = vst [vmem:[#allocation2 + $0xc8] sm:$0xff] %v920
        %953 = vst [vmem:[#allocation2 + $0xd0] sm:$0xff] %v921
        %954 = vst [vmem:[#allocation2 + $0xd8] sm:$0xff] %v922
        %955 = vst [vmem:[#allocation2 + $0xe0] sm:$0xff] %v923
        %956 = vst [vmem:[#allocation2 + $0xe8] sm:$0xff] %v924
        %957 = vst [vmem:[#allocation2 + $0xf0] sm:$0xff] %v925
        %958 = vst [vmem:[#allocation2 + $0xf8] sm:$0xff] %v926
        %p959 = scmp.eq.s32.totalorder %s18, 1
        // Predicated region
        $region71: #{gnn_forward.3} parent=61 // pred_check
          %p960 = pneg %p959
        $region72: #{gnn_forward.3} parent=61 // pred_check_branch
          %962 = sbr.rel (%p960) target = $region74
        $region73: #{gnn_forward.3} parent=61 // pred_region
          %v963 = vld [vmem:[#allocation2] sm:$0xff]
          %v964 = vld [vmem:[#allocation2 + $0x8] sm:$0xff]
          %v965 = vld [vmem:[#allocation2 + $0x10] sm:$0xff]
          %v966 = vld [vmem:[#allocation2 + $0x18] sm:$0xff]
          %v967 = vld [vmem:[#allocation2 + $0x20] sm:$0xff]
          %v968 = vld [vmem:[#allocation2 + $0x28] sm:$0xff]
          %v969 = vld [vmem:[#allocation2 + $0x30] sm:$0xff]
          %v970 = vld [vmem:[#allocation2 + $0x38] sm:$0xff]
          %v971 = vld [vmem:[#allocation2 + $0x40] sm:$0xff]
          %v972 = vld [vmem:[#allocation2 + $0x48] sm:$0xff]
          %v973 = vld [vmem:[#allocation2 + $0x50] sm:$0xff]
          %v974 = vld [vmem:[#allocation2 + $0x58] sm:$0xff]
          %v975 = vld [vmem:[#allocation2 + $0x60] sm:$0xff]
          %v976 = vld [vmem:[#allocation2 + $0x68] sm:$0xff]
          %v977 = vld [vmem:[#allocation2 + $0x70] sm:$0xff]
          %v978 = vld [vmem:[#allocation2 + $0x78] sm:$0xff]
          %v979 = vld [vmem:[#allocation2 + $0x80] sm:$0xff]
          %v980 = vld [vmem:[#allocation2 + $0x88] sm:$0xff]
          %v981 = vld [vmem:[#allocation2 + $0x90] sm:$0xff]
          %v982 = vld [vmem:[#allocation2 + $0x98] sm:$0xff]
          %v983 = vld [vmem:[#allocation2 + $0xa0] sm:$0xff]
          %v984 = vld [vmem:[#allocation2 + $0xa8] sm:$0xff]
          %v985 = vld [vmem:[#allocation2 + $0xb0] sm:$0xff]
          %v986 = vld [vmem:[#allocation2 + $0xb8] sm:$0xff]
          %v987 = vld [vmem:[#allocation2 + $0xc0] sm:$0xff]
          %v988 = vld [vmem:[#allocation2 + $0xc8] sm:$0xff]
          %v989 = vld [vmem:[#allocation2 + $0xd0] sm:$0xff]
          %v990 = vld [vmem:[#allocation2 + $0xd8] sm:$0xff]
          %v991 = vld [vmem:[#allocation2 + $0xe0] sm:$0xff]
          %v992 = vld [vmem:[#allocation2 + $0xe8] sm:$0xff]
          %v993 = vld [vmem:[#allocation2 + $0xf0] sm:$0xff]
          %v994 = vld [vmem:[#allocation2 + $0xf8] sm:$0xff]
          %995 = vst [vmem:[%s343] sm:$0xff] %v963
          %996 = vst [vmem:[%s343 + $0x8] sm:$0xff] %v964
          %997 = vst [vmem:[%s343 + $0x10] sm:$0xff] %v965
          %998 = vst [vmem:[%s343 + $0x18] sm:$0xff] %v966
          %999 = vst [vmem:[%s343 + $0x20] sm:$0xff] %v967
          %1000 = vst [vmem:[%s343 + $0x28] sm:$0xff] %v968
          %1001 = vst [vmem:[%s343 + $0x30] sm:$0xff] %v969
          %1002 = vst [vmem:[%s343 + $0x38] sm:$0xff] %v970
          %1003 = vst [vmem:[%s343 + $0x40] sm:$0xff] %v971
          %1004 = vst [vmem:[%s343 + $0x48] sm:$0xff] %v972
          %1005 = vst [vmem:[%s343 + $0x50] sm:$0xff] %v973
          %1006 = vst [vmem:[%s343 + $0x58] sm:$0xff] %v974
          %1007 = vst [vmem:[%s343 + $0x60] sm:$0xff] %v975
          %1008 = vst [vmem:[%s343 + $0x68] sm:$0xff] %v976
          %1009 = vst [vmem:[%s343 + $0x70] sm:$0xff] %v977
          %1010 = vst [vmem:[%s343 + $0x78] sm:$0xff] %v978
          %1011 = vst [vmem:[%s343 + $0x80] sm:$0xff] %v979
          %1012 = vst [vmem:[%s343 + $0x88] sm:$0xff] %v980
          %1013 = vst [vmem:[%s343 + $0x90] sm:$0xff] %v981
          %1014 = vst [vmem:[%s343 + $0x98] sm:$0xff] %v982
          %1015 = vst [vmem:[%s343 + $0xa0] sm:$0xff] %v983
          %1016 = vst [vmem:[%s343 + $0xa8] sm:$0xff] %v984
          %1017 = vst [vmem:[%s343 + $0xb0] sm:$0xff] %v985
          %1018 = vst [vmem:[%s343 + $0xb8] sm:$0xff] %v986
          %1019 = vst [vmem:[%s343 + $0xc0] sm:$0xff] %v987
          %1020 = vst [vmem:[%s343 + $0xc8] sm:$0xff] %v988
          %1021 = vst [vmem:[%s343 + $0xd0] sm:$0xff] %v989
          %1022 = vst [vmem:[%s343 + $0xd8] sm:$0xff] %v990
          %1023 = vst [vmem:[%s343 + $0xe0] sm:$0xff] %v991
          %1024 = vst [vmem:[%s343 + $0xe8] sm:$0xff] %v992
          %1025 = vst [vmem:[%s343 + $0xf0] sm:$0xff] %v993
          %1026 = vst [vmem:[%s343 + $0xf8] sm:$0xff] %v994
        $region74: #{gnn_forward.3} parent=61 // pred_fallthru
          _
        %s1027 = smul.u32 32, %s17
        %p1028 = scmp.lt.s32.totalorder %s1027, 63
        %s1029 = scalar_select %p1028, %s1027, 63
        %s1030 = smul.addr %s1029, 8
        %s1031 = scalar_lea.vmem %s2, %s1030
        // Predicated region
        $region75: #{gnn_forward.3} parent=61 // pred_check
          %p1032 = pneg %p97
        $region76: #{gnn_forward.3} parent=61 // pred_check_branch
          %1034 = sbr.rel (%p1032) target = $region78
        $region77: #{gnn_forward.3} parent=61 // pred_region
          %s1035 = smul.u32 32, %s17
        $region78: #{gnn_forward.3} parent=61 // pred_fallthru
          _
      $region62: #{gnn_forward.3} parent=5 // pred_fallthru
        _
      %p1036 = scmp.le.s32.totalorder 2, %s8
      // Predicated region
      $region79: #{gnn_forward.3} parent=5 // pred_check
        %p1037 = pneg %p1036
      $region80: #{gnn_forward.3} parent=5 // pred_check_branch
        %1039 = sbr.rel (%p1037) target = $region82
      $region81: #{gnn_forward.3} parent=5 // pred_region
        %s1040 = ssub.s32 %s8, 2
        // Predicated region
        $region83: #{gnn_forward.3} parent=81 // pred_check
          %p1041 = pneg %p103
        $region84: #{gnn_forward.3} parent=81 // pred_check_branch
          %1043 = sbr.rel (%p1041) target = $region86
        $region85: #{gnn_forward.3} parent=81 // pred_region
          %s1044 = smul.u32 32, %s19
          %p1045 = scmp.lt.s32.totalorder %s1044, 63
          %s1046 = scalar_select %p1045, %s1044, 63
          %s1047 = smul.addr %s1046, 8
          %s1048 = scalar_lea.vmem %s2, %s1047
        $region86: #{gnn_forward.3} parent=81 // pred_fallthru
          _
      $region82: #{gnn_forward.3} parent=5 // pred_fallthru
        _
    $region6: #{gnn_forward.3} parent=1 // loop_footer
      %s12 = sadd.s32 1, %s8
    $region7: #{gnn_forward.3} parent=1 // loop_footer_branch
      %7 = sbr.rel target = $region3
    $region8: #{gnn_forward.3} parent=1 // loop_exit
      _

// kernel: gnn_forward.2
$region0: #{gnn_forward.2}
  #allocation0 [shape = 'u32[]', space=smem, size = 0x4, offset = 0x4, fixed_abs, tag = 'smem constant byte address 0x4 - core index']
  #allocation1 [shape = 'u32[144,128]{1,0:T(1,128)}', space=vmem, size = 0x12000, scoped, tag = 'internal scratch']
  #allocation2 [shape = 'f32[256,128]{1,0:T(8,128)}', space=vmem, size = 0x20000, scoped, tag = 'scratch operand']
  %s0 = inlined_call_operand.vmem [shape: bf16[512,512], index: 0, kind: input, shape index: {}]
  %s1 = inlined_call_operand.vmem [shape: f32[512,1], index: 1, kind: input, shape index: {}]
  %s2 = inlined_call_operand.vmem [shape: f32[1,128], index: 2, kind: input, shape index: {}]
  %s3 = inlined_call_operand.vmem [shape: f32[1,128], index: 3, kind: input, shape index: {}]
  %s4 = inlined_call_operand.vmem [shape: bf16[512,128], index: 4, kind: output, shape index: {}]
  %s5 = sld [smem:[#allocation0]]
  $region95: #{gnn_forward.2} parent=0
    _
  %s7 = ssub.s32 1, %s5
  %s8 = scalar_select 0, %s7, %s5
  $region1: #{gnn_forward.2} parent=0
    #allocation3 [shape = 'u8[262144]{0}', space=vmem, size = 0x40000, scoped, tag = 'input window, operand 0']
    loop: start=0, step=1, limit=6
    $region2: #{gnn_forward.2} parent=1 // loop_pre_header
      _
    $region3: #{gnn_forward.2} parent=1 // loop_header
      %s10 = sphi 0, %s14
      %p11 = scmp.ge.s32.totalorder %s10, 6
      %s17 = sphi 0, %s29
      %s18 = sphi 0, %s25
      %s19 = sphi 0, %s17
      %s20 = sphi 0, %s18
      %s21 = sphi 0, %s19
      %s22 = sphi 0, %s20
      %s34 = sphi 0, %s36
      %s37 = sphi 0, %s34
      %s38 = sphi 0, %s37
      %s54 = sphi 0, %s38
      %s60 = sphi 0, %s62
      %s63 = sphi 0, %s60
      %s64 = sphi 0, %s63
      %s80 = sphi 0, %s64
      %s84 = sphi 0, %s84
      %s86 = sphi 0, %s84
      %s87 = sphi 0, %s86
      %s101 = sphi 0, %s87
      %s105 = sphi 0, %s105
      %s107 = sphi 0, %s105
      %s108 = sphi 0, %s107
      %s122 = sphi 0, %s108
      %s128 = sphi 0, %s130
      %s131 = sphi 0, %s128
      %s132 = sphi 0, %s131
      %s148 = sphi 0, %s132
    $region4: #{gnn_forward.2} parent=1 // loop_header_branch
      %13 = sbr.rel (%p11) target = $region8
    $region5: #{gnn_forward.2} parent=1 // loop_body
      %s15 = ssub.s32 %s10, 1
      %s16 = ssub.s32 %s10, 2
      %s23 = sadd.s32 1, %s18
      %p24 = scmp.ge.s32.totalorder %s23, 2
      %s25 = scalar_select %p24, 0, %s23
      %s26 = sadd.s32 1, %s17
      %s27 = scalar_select %p24, %s26, %s17
      %p28 = scmp.ge.s32.totalorder %s27, 2
      %s29 = scalar_select %p28, 0, %s27
      %s30 = ssub.s32 %s17, %s29
      %s31 = ssub.s32 %s18, %s25
      %s32 = sor.u32 %s30, %s31
      %p33 = scmp.eq.s32.totalorder %s32, 0
      %s35 = sadd.s32 %s34, 1
      %s36 = scalar_select %p33, %s34, %s35
      %p39 = pneg %p33
      %p40 = scmp.eq.s32.totalorder %s10, 3
      %p41 = por %p39, %p40
      %p42 = scmp.ne.s32.totalorder %s34, %s37
      %p43 = scmp.eq.s32.totalorder %s10, 0
      %p44 = por %p42, %p43
      %p45 = scmp.ne.s32.totalorder %s34, %s37
      %p46 = scmp.eq.s32.totalorder %s15, 3
      %p47 = por %p45, %p46
      %p48 = scmp.ne.s32.totalorder %s37, %s38
      %p49 = scmp.eq.s32.totalorder %s15, 0
      %p50 = por %p48, %p49
      %p51 = scmp.ne.s32.totalorder %s37, %s38
      %p52 = scmp.eq.s32.totalorder %s16, 3
      %p53 = por %p51, %p52
      %p55 = scmp.ne.s32.totalorder %s38, %s54
      %p56 = scmp.eq.s32.totalorder %s16, 0
      %p57 = por %p55, %p56
      %s58 = ssub.s32 %s18, %s25
      %p59 = scmp.eq.s32.totalorder %s58, 0
      %s61 = sadd.s32 %s60, 1
      %s62 = scalar_select %p59, %s60, %s61
      %p65 = pneg %p59
      %p66 = scmp.eq.s32.totalorder %s10, 3
      %p67 = por %p65, %p66
      %p68 = scmp.ne.s32.totalorder %s60, %s63
      %p69 = scmp.eq.s32.totalorder %s10, 0
      %p70 = por %p68, %p69
      %p71 = scmp.ne.s32.totalorder %s60, %s63
      %p72 = scmp.eq.s32.totalorder %s15, 3
      %p73 = por %p71, %p72
      %p74 = scmp.ne.s32.totalorder %s63, %s64
      %p75 = scmp.eq.s32.totalorder %s15, 0
      %p76 = por %p74, %p75
      %p77 = scmp.ne.s32.totalorder %s63, %s64
      %p78 = scmp.eq.s32.totalorder %s16, 3
      %p79 = por %p77, %p78
      %p81 = scmp.ne.s32.totalorder %s64, %s80
      %p82 = scmp.eq.s32.totalorder %s16, 0
      %p83 = por %p81, %p82
      %s85 = sadd.s32 %s84, 1
      %p88 = scmp.eq.s32.totalorder %s10, 3
      %p89 = scmp.ne.s32.totalorder %s84, %s86
      %p90 = scmp.eq.s32.totalorder %s10, 0
      %p91 = por %p89, %p90
      %p92 = scmp.ne.s32.totalorder %s84, %s86
      %p93 = scmp.eq.s32.totalorder %s15, 3
      %p94 = por %p92, %p93
      %p95 = scmp.ne.s32.totalorder %s86, %s87
      %p96 = scmp.eq.s32.totalorder %s15, 0
      %p97 = por %p95, %p96
      %p98 = scmp.ne.s32.totalorder %s86, %s87
      %p99 = scmp.eq.s32.totalorder %s16, 3
      %p100 = por %p98, %p99
      %p102 = scmp.ne.s32.totalorder %s87, %s101
      %p103 = scmp.eq.s32.totalorder %s16, 0
      %p104 = por %p102, %p103
      %s106 = sadd.s32 %s105, 1
      %p109 = scmp.eq.s32.totalorder %s10, 3
      %p110 = scmp.ne.s32.totalorder %s105, %s107
      %p111 = scmp.eq.s32.totalorder %s10, 0
      %p112 = por %p110, %p111
      %p113 = scmp.ne.s32.totalorder %s105, %s107
      %p114 = scmp.eq.s32.totalorder %s15, 3
      %p115 = por %p113, %p114
      %p116 = scmp.ne.s32.totalorder %s107, %s108
      %p117 = scmp.eq.s32.totalorder %s15, 0
      %p118 = por %p116, %p117
      %p119 = scmp.ne.s32.totalorder %s107, %s108
      %p120 = scmp.eq.s32.totalorder %s16, 3
      %p121 = por %p119, %p120
      %p123 = scmp.ne.s32.totalorder %s108, %s122
      %p124 = scmp.eq.s32.totalorder %s16, 0
      %p125 = por %p123, %p124
      %s126 = ssub.s32 %s17, %s29
      %p127 = scmp.eq.s32.totalorder %s126, 0
      %s129 = sadd.s32 %s128, 1
      %s130 = scalar_select %p127, %s128, %s129
      %p133 = pneg %p127
      %p134 = scmp.eq.s32.totalorder %s10, 3
      %p135 = por %p133, %p134
      %p136 = scmp.ne.s32.totalorder %s128, %s131
      %p137 = scmp.eq.s32.totalorder %s10, 0
      %p138 = por %p136, %p137
      %p139 = scmp.ne.s32.totalorder %s128, %s131
      %p140 = scmp.eq.s32.totalorder %s15, 3
      %p141 = por %p139, %p140
      %p142 = scmp.ne.s32.totalorder %s131, %s132
      %p143 = scmp.eq.s32.totalorder %s15, 0
      %p144 = por %p142, %p143
      %p145 = scmp.ne.s32.totalorder %s131, %s132
      %p146 = scmp.eq.s32.totalorder %s16, 3
      %p147 = por %p145, %p146
      %p149 = scmp.ne.s32.totalorder %s132, %s148
      %p150 = scmp.eq.s32.totalorder %s16, 0
      %p151 = por %p149, %p150
      %p152 = scmp.le.s32.totalorder 1, %s10
      %p153 = scmp.lt.s32.totalorder %s10, 5
      %p154 = pnand %p152, %p153
      %p155 = pneg %p154
      // Predicated region
      $region9: #{gnn_forward.2} parent=5 // pred_check
        _
      $region10: #{gnn_forward.2} parent=5 // pred_check_branch
        %157 = sbr.rel (%p154) target = $region12
      $region11: #{gnn_forward.2} parent=5 // pred_region
        %s158 = ssub.s32 %s10, 1
        // Predicated region
        $region13: #{gnn_forward.2} parent=11 // pred_check
          %p159 = pneg %p97
        $region14: #{gnn_forward.2} parent=11 // pred_check_branch
          %161 = sbr.rel (%p159) target = $region16
        $region15: #{gnn_forward.2} parent=11 // pred_region
          _
        $region16: #{gnn_forward.2} parent=11 // pred_fallthru
          _
        // Predicated region
        $region17: #{gnn_forward.2} parent=11 // pred_check
          %p162 = pneg %p118
        $region18: #{gnn_forward.2} parent=11 // pred_check_branch
          %164 = sbr.rel (%p162) target = $region20
        $region19: #{gnn_forward.2} parent=11 // pred_region
          _
        $region20: #{gnn_forward.2} parent=11 // pred_fallthru
          _
      $region12: #{gnn_forward.2} parent=5 // pred_fallthru
        _
      %p165 = scmp.lt.s32.totalorder %s10, 4
      // Predicated region
      $region21: #{gnn_forward.2} parent=5 // pred_check
        %p166 = pneg %p165
      $region22: #{gnn_forward.2} parent=5 // pred_check_branch
        %168 = sbr.rel (%p166) target = $region24
      $region23: #{gnn_forward.2} parent=5 // pred_region
        // Predicated region
        $region25: #{gnn_forward.2} parent=23 // pred_check
          %p169 = pneg %p44
        $region26: #{gnn_forward.2} parent=23 // pred_check_branch
          %171 = sbr.rel (%p169) target = $region28
        $region27: #{gnn_forward.2} parent=23 // pred_region
          %s172 = sand.u32 %s34, 1
          %s173 = sand.u32 %s34, 1
          %s174 = smul.addr %s173, 256
          %s175 = scalar_lea.vmem [#allocation3], %s174
          %s176 = smul.u32 32, %s17
          %s177 = smul.u32 2, %s18
          %s178 = smul.addr %s176, 4
          %s179 = sadd.s32 %s177, %s178
          %s180 = smul.addr %s179, 4
          %s181 = scalar_lea.vmem %s0, %s180
          // Predicated region
          $region29: #{gnn_forward.2} parent=27 // pred_check
            _
          $region30: #{gnn_forward.2} parent=27 // pred_check_branch
            %183 = sbr.rel (0) target = $region32
          $region31: #{gnn_forward.2} parent=27 // pred_region
            // Predicated region
            $region33: #{gnn_forward.2} parent=31 // pred_check
              _
            $region34: #{gnn_forward.2} parent=31 // pred_check_branch
              %185 = sbr.rel (0) target = $region36
            $region35: #{gnn_forward.2} parent=31 // pred_region
              // Predicated region
              $region48: #{gnn_forward.2} parent=35 // pred_check
                _
              $region49: #{gnn_forward.2} parent=35 // pred_check_branch
                %262 = sbr.rel (0) target = $region51
              $region50: #{gnn_forward.2} parent=35 // pred_region
                loop: start=0, step=1, limit=1
                $region52: #{gnn_forward.2} parent=50 // loop_pre_header
                  _
                $region53: #{gnn_forward.2} parent=50 // loop_header
                  %s264 = sphi 0, %s268
                  %p265 = scmp.ge.s32.totalorder %s264, 1
                  %s269 = sphi %s181, %s181
                  %s270 = sphi %s175, %s175
                $region54: #{gnn_forward.2} parent=50 // loop_header_branch
                  %267 = sbr.rel (%p265) target = $region58
                $region55: #{gnn_forward.2} parent=50 // loop_body
                  %v271 = vld [vmem:[%s269] sm:$0xff]
                  %272 = vst [vmem:[%s270] sm:$0xff] %v271
                  %v273 = vld [vmem:[%s269 + $0x10] sm:$0xff]
                  %274 = vst [vmem:[%s270 + $0x8] sm:$0xff] %v273
                  %v275 = vld [vmem:[%s269 + $0x20] sm:$0xff]
                  %276 = vst [vmem:[%s270 + $0x10] sm:$0xff] %v275
                  %v277 = vld [vmem:[%s269 + $0x30] sm:$0xff]
                  %278 = vst [vmem:[%s270 + $0x18] sm:$0xff] %v277
                  %v279 = vld [vmem:[%s269 + $0x40] sm:$0xff]
                  %280 = vst [vmem:[%s270 + $0x20] sm:$0xff] %v279
                  %v281 = vld [vmem:[%s269 + $0x50] sm:$0xff]
                  %282 = vst [vmem:[%s270 + $0x28] sm:$0xff] %v281
                  %v283 = vld [vmem:[%s269 + $0x60] sm:$0xff]
                  %284 = vst [vmem:[%s270 + $0x30] sm:$0xff] %v283
                  %v285 = vld [vmem:[%s269 + $0x70] sm:$0xff]
                  %286 = vst [vmem:[%s270 + $0x38] sm:$0xff] %v285
                  %v287 = vld [vmem:[%s269 + $0x80] sm:$0xff]
                  %288 = vst [vmem:[%s270 + $0x40] sm:$0xff] %v287
                  %v289 = vld [vmem:[%s269 + $0x90] sm:$0xff]
                  %290 = vst [vmem:[%s270 + $0x48] sm:$0xff] %v289
                  %v291 = vld [vmem:[%s269 + $0xa0] sm:$0xff]
                  %292 = vst [vmem:[%s270 + $0x50] sm:$0xff] %v291
                  %v293 = vld [vmem:[%s269 + $0xb0] sm:$0xff]
                  %294 = vst [vmem:[%s270 + $0x58] sm:$0xff] %v293
                  %v295 = vld [vmem:[%s269 + $0xc0] sm:$0xff]
                  %296 = vst [vmem:[%s270 + $0x60] sm:$0xff] %v295
                  %v297 = vld [vmem:[%s269 + $0xd0] sm:$0xff]
                  %298 = vst [vmem:[%s270 + $0x68] sm:$0xff] %v297
                  %v299 = vld [vmem:[%s269 + $0xe0] sm:$0xff]
                  %300 = vst [vmem:[%s270 + $0x70] sm:$0xff] %v299
                  %v301 = vld [vmem:[%s269 + $0xf0] sm:$0xff]
                  %302 = vst [vmem:[%s270 + $0x78] sm:$0xff] %v301
                  %v303 = vld [vmem:[%s269 + $0x100] sm:$0xff]
                  %304 = vst [vmem:[%s270 + $0x80] sm:$0xff] %v303
                  %v305 = vld [vmem:[%s269 + $0x110] sm:$0xff]
                  %306 = vst [vmem:[%s270 + $0x88] sm:$0xff] %v305
                  %v307 = vld [vmem:[%s269 + $0x120] sm:$0xff]
                  %308 = vst [vmem:[%s270 + $0x90] sm:$0xff] %v307
                  %v309 = vld [vmem:[%s269 + $0x130] sm:$0xff]
                  %310 = vst [vmem:[%s270 + $0x98] sm:$0xff] %v309
                  %v311 = vld [vmem:[%s269 + $0x140] sm:$0xff]
                  %312 = vst [vmem:[%s270 + $0xa0] sm:$0xff] %v311
                  %v313 = vld [vmem:[%s269 + $0x150] sm:$0xff]
                  %314 = vst [vmem:[%s270 + $0xa8] sm:$0xff] %v313
                  %v315 = vld [vmem:[%s269 + $0x160] sm:$0xff]
                  %316 = vst [vmem:[%s270 + $0xb0] sm:$0xff] %v315
                  %v317 = vld [vmem:[%s269 + $0x170] sm:$0xff]
                  %318 = vst [vmem:[%s270 + $0xb8] sm:$0xff] %v317
                  %v319 = vld [vmem:[%s269 + $0x180] sm:$0xff]
                  %320 = vst [vmem:[%s270 + $0xc0] sm:$0xff] %v319
                  %v321 = vld [vmem:[%s269 + $0x190] sm:$0xff]
                  %322 = vst [vmem:[%s270 + $0xc8] sm:$0xff] %v321
                  %v323 = vld [vmem:[%s269 + $0x1a0] sm:$0xff]
                  %324 = vst [vmem:[%s270 + $0xd0] sm:$0xff] %v323
                  %v325 = vld [vmem:[%s269 + $0x1b0] sm:$0xff]
                  %326 = vst [vmem:[%s270 + $0xd8] sm:$0xff] %v325
                  %v327 = vld [vmem:[%s269 + $0x1c0] sm:$0xff]
                  %328 = vst [vmem:[%s270 + $0xe0] sm:$0xff] %v327
                  %v329 = vld [vmem:[%s269 + $0x1d0] sm:$0xff]
                  %330 = vst [vmem:[%s270 + $0xe8] sm:$0xff] %v329
                  %v331 = vld [vmem:[%s269 + $0x1e0] sm:$0xff]
                  %332 = vst [vmem:[%s270 + $0xf0] sm:$0xff] %v331
                  %v333 = vld [vmem:[%s269 + $0x1f0] sm:$0xff]
                  %334 = vst [vmem:[%s270 + $0xf8] sm:$0xff] %v333
                $region56: #{gnn_forward.2} parent=50 // loop_footer
                  %s268 = sadd.s32 1, %s264
                $region57: #{gnn_forward.2} parent=50 // loop_footer_branch
                  %263 = sbr.rel target = $region53
                $region58: #{gnn_forward.2} parent=50 // loop_exit
                  _
              $region51: #{gnn_forward.2} parent=35 // pred_fallthru
                _
              // Predicated region
              $region59: #{gnn_forward.2} parent=35 // pred_check
                _
              $region60: #{gnn_forward.2} parent=35 // pred_check_branch
                %336 = sbr.rel target = $region62
              $region61: #{gnn_forward.2} parent=35 // pred_region
                _
              $region62: #{gnn_forward.2} parent=35 // pred_fallthru
                _
            $region36: #{gnn_forward.2} parent=31 // pred_fallthru
              _
            // Predicated region
            $region37: #{gnn_forward.2} parent=31 // pred_check
              _
            $region38: #{gnn_forward.2} parent=31 // pred_check_branch
              %187 = sbr.rel target = $region40
            $region39: #{gnn_forward.2} parent=31 // pred_region
              loop: start=0, step=1, limit=1
              $region41: #{gnn_forward.2} parent=39 // loop_pre_header
                _
              $region42: #{gnn_forward.2} parent=39 // loop_header
                %s190 = sphi 0, %s194
                %p191 = scmp.ge.s32.totalorder %s190, 1
                %s195 = sphi %s181, %s181
                %s196 = sphi %s175, %s175
              $region43: #{gnn_forward.2} parent=39 // loop_header_branch
                %193 = sbr.rel (%p191) target = $region47
              $region44: #{gnn_forward.2} parent=39 // loop_body
                %v197 = vld [vmem:[%s195] sm:$0xff]
                %198 = vst [vmem:[%s196] sm:$0xff] %v197
                %v199 = vld [vmem:[%s195 + $0x10] sm:$0xff]
                %200 = vst [vmem:[%s196 + $0x8] sm:$0xff] %v199
                %v201 = vld [vmem:[%s195 + $0x20] sm:$0xff]
                %202 = vst [vmem:[%s196 + $0x10] sm:$0xff] %v201
                %v203 = vld [vmem:[%s195 + $0x30] sm:$0xff]
                %204 = vst [vmem:[%s196 + $0x18] sm:$0xff] %v203
                %v205 = vld [vmem:[%s195 + $0x40] sm:$0xff]
                %206 = vst [vmem:[%s196 + $0x20] sm:$0xff] %v205
                %v207 = vld [vmem:[%s195 + $0x50] sm:$0xff]
                %208 = vst [vmem:[%s196 + $0x28] sm:$0xff] %v207
                %v209 = vld [vmem:[%s195 + $0x60] sm:$0xff]
                %210 = vst [vmem:[%s196 + $0x30] sm:$0xff] %v209
                %v211 = vld [vmem:[%s195 + $0x70] sm:$0xff]
                %212 = vst [vmem:[%s196 + $0x38] sm:$0xff] %v211
                %v213 = vld [vmem:[%s195 + $0x80] sm:$0xff]
                %214 = vst [vmem:[%s196 + $0x40] sm:$0xff] %v213
                %v215 = vld [vmem:[%s195 + $0x90] sm:$0xff]
                %216 = vst [vmem:[%s196 + $0x48] sm:$0xff] %v215
                %v217 = vld [vmem:[%s195 + $0xa0] sm:$0xff]
                %218 = vst [vmem:[%s196 + $0x50] sm:$0xff] %v217
                %v219 = vld [vmem:[%s195 + $0xb0] sm:$0xff]
                %220 = vst [vmem:[%s196 + $0x58] sm:$0xff] %v219
                %v221 = vld [vmem:[%s195 + $0xc0] sm:$0xff]
                %222 = vst [vmem:[%s196 + $0x60] sm:$0xff] %v221
                %v223 = vld [vmem:[%s195 + $0xd0] sm:$0xff]
                %224 = vst [vmem:[%s196 + $0x68] sm:$0xff] %v223
                %v225 = vld [vmem:[%s195 + $0xe0] sm:$0xff]
                %226 = vst [vmem:[%s196 + $0x70] sm:$0xff] %v225
                %v227 = vld [vmem:[%s195 + $0xf0] sm:$0xff]
                %228 = vst [vmem:[%s196 + $0x78] sm:$0xff] %v227
                %v229 = vld [vmem:[%s195 + $0x100] sm:$0xff]
                %230 = vst [vmem:[%s196 + $0x80] sm:$0xff] %v229
                %v231 = vld [vmem:[%s195 + $0x110] sm:$0xff]
                %232 = vst [vmem:[%s196 + $0x88] sm:$0xff] %v231
                %v233 = vld [vmem:[%s195 + $0x120] sm:$0xff]
                %234 = vst [vmem:[%s196 + $0x90] sm:$0xff] %v233
                %v235 = vld [vmem:[%s195 + $0x130] sm:$0xff]
                %236 = vst [vmem:[%s196 + $0x98] sm:$0xff] %v235
                %v237 = vld [vmem:[%s195 + $0x140] sm:$0xff]
                %238 = vst [vmem:[%s196 + $0xa0] sm:$0xff] %v237
                %v239 = vld [vmem:[%s195 + $0x150] sm:$0xff]
                %240 = vst [vmem:[%s196 + $0xa8] sm:$0xff] %v239
                %v241 = vld [vmem:[%s195 + $0x160] sm:$0xff]
                %242 = vst [vmem:[%s196 + $0xb0] sm:$0xff] %v241
                %v243 = vld [vmem:[%s195 + $0x170] sm:$0xff]
                %244 = vst [vmem:[%s196 + $0xb8] sm:$0xff] %v243
                %v245 = vld [vmem:[%s195 + $0x180] sm:$0xff]
                %246 = vst [vmem:[%s196 + $0xc0] sm:$0xff] %v245
                %v247 = vld [vmem:[%s195 + $0x190] sm:$0xff]
                %248 = vst [vmem:[%s196 + $0xc8] sm:$0xff] %v247
                %v249 = vld [vmem:[%s195 + $0x1a0] sm:$0xff]
                %250 = vst [vmem:[%s196 + $0xd0] sm:$0xff] %v249
                %v251 = vld [vmem:[%s195 + $0x1b0] sm:$0xff]
                %252 = vst [vmem:[%s196 + $0xd8] sm:$0xff] %v251
                %v253 = vld [vmem:[%s195 + $0x1c0] sm:$0xff]
                %254 = vst [vmem:[%s196 + $0xe0] sm:$0xff] %v253
                %v255 = vld [vmem:[%s195 + $0x1d0] sm:$0xff]
                %256 = vst [vmem:[%s196 + $0xe8] sm:$0xff] %v255
                %v257 = vld [vmem:[%s195 + $0x1e0] sm:$0xff]
                %258 = vst [vmem:[%s196 + $0xf0] sm:$0xff] %v257
                %v259 = vld [vmem:[%s195 + $0x1f0] sm:$0xff]
                %260 = vst [vmem:[%s196 + $0xf8] sm:$0xff] %v259
              $region45: #{gnn_forward.2} parent=39 // loop_footer
                %s194 = sadd.s32 1, %s190
              $region46: #{gnn_forward.2} parent=39 // loop_footer_branch
                %189 = sbr.rel target = $region42
              $region47: #{gnn_forward.2} parent=39 // loop_exit
                _
            $region40: #{gnn_forward.2} parent=31 // pred_fallthru
              _
          $region32: #{gnn_forward.2} parent=27 // pred_fallthru
            _
          %337 = vnop
        $region28: #{gnn_forward.2} parent=23 // pred_fallthru
          _
        // Predicated region
        $region63: #{gnn_forward.2} parent=23 // pred_check
          %p338 = pneg %p70
        $region64: #{gnn_forward.2} parent=23 // pred_check_branch
          %340 = sbr.rel (%p338) target = $region66
        $region65: #{gnn_forward.2} parent=23 // pred_region
          %s341 = smul.u32 32, %s18
          %p342 = scmp.lt.s32.totalorder %s341, 63
          %s343 = scalar_select %p342, %s341, 63
          %s344 = smul.addr %s343, 8
          %s345 = scalar_lea.vmem %s1, %s344
          %s346 = smul.u32 32, %s18
        $region66: #{gnn_forward.2} parent=23 // pred_fallthru
          _
      $region24: #{gnn_forward.2} parent=5 // pred_fallthru
        _
      %p347 = scmp.le.s32.totalorder 1, %s10
      %p348 = scmp.lt.s32.totalorder %s10, 5
      %p349 = pnand %p347, %p348
      %p350 = pneg %p349
      // Predicated region
      $region67: #{gnn_forward.2} parent=5 // pred_check
        _
      $region68: #{gnn_forward.2} parent=5 // pred_check_branch
        %352 = sbr.rel (%p349) target = $region70
      $region69: #{gnn_forward.2} parent=5 // pred_region
        %s353 = ssub.s32 %s10, 1
        %s354 = sand.u32 %s37, 1
        %s355 = sand.u32 %s37, 1
        %s356 = smul.addr %s355, 256
        %s357 = scalar_lea.vmem [#allocation3], %s356
        // Predicated region
        $region71: #{gnn_forward.2} parent=69 // pred_check
          %p358 = pneg %p50
        $region72: #{gnn_forward.2} parent=69 // pred_check_branch
          %360 = sbr.rel (%p358) target = $region74
        $region73: #{gnn_forward.2} parent=69 // pred_region
          _
        $region74: #{gnn_forward.2} parent=69 // pred_fallthru
          _
        %s361 = sand.u32 %s37, 1
        %s362 = sand.u32 %s37, 1
        %s363 = smul.addr %s362, 256
        %s364 = scalar_lea.vmem [#allocation3], %s363
        %p365 = pneg %p50
        %p366 = pneg %p47
        %s367 = smul.u32 32, %s20
        %p368 = scmp.lt.s32.totalorder %s367, 63
        %s369 = scalar_select %p368, %s367, 63
        %s370 = smul.addr %s369, 8
        %s371 = scalar_lea.vmem %s1, %s370
        %p372 = pneg %p76
        %p373 = pneg %p73
        %p374 = pneg %p97
        %p375 = pneg %p94
        %p376 = pneg %p118
        %p377 = pneg %p115
        %p378 = pneg %p144
        %p379 = pneg %p141
        %s380 = smul.u32 32, %s19
        %p381 = scmp.lt.s32.totalorder %s380, 63
        %s382 = scalar_select %p381, %s380, 63
        %s383 = smul.addr %s382, 4
        %s384 = scalar_lea.vmem %s4, %s383
        %s385 = smul.u32 32, %s19
        %s386 = smul.u32 2, %s20
        %s387 = smul.u32 32, %s20
        %p388 = scmp.lt.s32.totalorder %s387, 63
        %s389 = scalar_select %p388, %s387, 63
        %s390 = smul.addr %s389, 8
        %s391 = scalar_lea.vmem %s1, %s390
        %s392 = smul.u32 32, %s20
        %s393 = smul.u32 32, %s19
        %p394 = scmp.lt.s32.totalorder %s393, 63
        %s395 = scalar_select %p394, %s393, 63
        %s396 = smul.addr %s395, 4
        %s397 = scalar_lea.vmem %s4, %s396
        %s398 = smul.u32 32, %s19
        %p400 = scmp.eq.s32.totalorder %s20, 0
        // Predicated region
        $region75: #{gnn_forward.2} parent=69 // pred_check
          %p401 = pneg %p400
        $region76: #{gnn_forward.2} parent=69 // pred_check_branch
          %403 = sbr.rel (%p401) target = $region78
        $region77: #{gnn_forward.2} parent=69 // pred_region
          %404 = vst [vmem:[#allocation2] sm:$0xff] 0.0
          %405 = vst [vmem:[#allocation2 + $0x8] sm:$0xff] 0.0
          %406 = vst [vmem:[#allocation2 + $0x10] sm:$0xff] 0.0
          %407 = vst [vmem:[#allocation2 + $0x18] sm:$0xff] 0.0
          %408 = vst [vmem:[#allocation2 + $0x20] sm:$0xff] 0.0
          %409 = vst [vmem:[#allocation2 + $0x28] sm:$0xff] 0.0
          %410 = vst [vmem:[#allocation2 + $0x30] sm:$0xff] 0.0
          %411 = vst [vmem:[#allocation2 + $0x38] sm:$0xff] 0.0
          %412 = vst [vmem:[#allocation2 + $0x40] sm:$0xff] 0.0
          %413 = vst [vmem:[#allocation2 + $0x48] sm:$0xff] 0.0
          %414 = vst [vmem:[#allocation2 + $0x50] sm:$0xff] 0.0
          %415 = vst [vmem:[#allocation2 + $0x58] sm:$0xff] 0.0
          %416 = vst [vmem:[#allocation2 + $0x60] sm:$0xff] 0.0
          %417 = vst [vmem:[#allocation2 + $0x68] sm:$0xff] 0.0
          %418 = vst [vmem:[#allocation2 + $0x70] sm:$0xff] 0.0
          %419 = vst [vmem:[#allocation2 + $0x78] sm:$0xff] 0.0
          %420 = vst [vmem:[#allocation2 + $0x80] sm:$0xff] 0.0
          %421 = vst [vmem:[#allocation2 + $0x88] sm:$0xff] 0.0
          %422 = vst [vmem:[#allocation2 + $0x90] sm:$0xff] 0.0
          %423 = vst [vmem:[#allocation2 + $0x98] sm:$0xff] 0.0
          %424 = vst [vmem:[#allocation2 + $0xa0] sm:$0xff] 0.0
          %425 = vst [vmem:[#allocation2 + $0xa8] sm:$0xff] 0.0
          %426 = vst [vmem:[#allocation2 + $0xb0] sm:$0xff] 0.0
          %427 = vst [vmem:[#allocation2 + $0xb8] sm:$0xff] 0.0
          %428 = vst [vmem:[#allocation2 + $0xc0] sm:$0xff] 0.0
          %429 = vst [vmem:[#allocation2 + $0xc8] sm:$0xff] 0.0
          %430 = vst [vmem:[#allocation2 + $0xd0] sm:$0xff] 0.0
          %431 = vst [vmem:[#allocation2 + $0xd8] sm:$0xff] 0.0
          %432 = vst [vmem:[#allocation2 + $0xe0] sm:$0xff] 0.0
          %433 = vst [vmem:[#allocation2 + $0xe8] sm:$0xff] 0.0
          %434 = vst [vmem:[#allocation2 + $0xf0] sm:$0xff] 0.0
          %435 = vst [vmem:[#allocation2 + $0xf8] sm:$0xff] 0.0
        $region78: #{gnn_forward.2} parent=69 // pred_fallthru
          _
        %v436 = vld [vmem:[%s391] sm:$0xff]
        %v437 = vld [vmem:[%s391 + $0x8] sm:$0xff]
        %v438 = vld [vmem:[%s391 + $0x10] sm:$0xff]
        %v439 = vld [vmem:[%s391 + $0x18] sm:$0xff]
        %v440 = vld [vmem:[%s391 + $0x20] sm:$0xff]
        %v441 = vld [vmem:[%s391 + $0x28] sm:$0xff]
        %v442 = vld [vmem:[%s391 + $0x30] sm:$0xff]
        %v443 = vld [vmem:[%s391 + $0x38] sm:$0xff]
        %v444 = vld [vmem:[%s391 + $0x40] sm:$0xff]
        %v445 = vld [vmem:[%s391 + $0x48] sm:$0xff]
        %v446 = vld [vmem:[%s391 + $0x50] sm:$0xff]
        %v447 = vld [vmem:[%s391 + $0x58] sm:$0xff]
        %v448 = vld [vmem:[%s391 + $0x60] sm:$0xff]
        %v449 = vld [vmem:[%s391 + $0x68] sm:$0xff]
        %v450 = vld [vmem:[%s391 + $0x70] sm:$0xff]
        %v451 = vld [vmem:[%s391 + $0x78] sm:$0xff]
        %v452 = vld [vmem:[%s391 + $0x80] sm:$0xff]
        %v453 = vld [vmem:[%s391 + $0x88] sm:$0xff]
        %v454 = vld [vmem:[%s391 + $0x90] sm:$0xff]
        %v455 = vld [vmem:[%s391 + $0x98] sm:$0xff]
        %v456 = vld [vmem:[%s391 + $0xa0] sm:$0xff]
        %v457 = vld [vmem:[%s391 + $0xa8] sm:$0xff]
        %v458 = vld [vmem:[%s391 + $0xb0] sm:$0xff]
        %v459 = vld [vmem:[%s391 + $0xb8] sm:$0xff]
        %v460 = vld [vmem:[%s391 + $0xc0] sm:$0xff]
        %v461 = vld [vmem:[%s391 + $0xc8] sm:$0xff]
        %v462 = vld [vmem:[%s391 + $0xd0] sm:$0xff]
        %v463 = vld [vmem:[%s391 + $0xd8] sm:$0xff]
        %v464 = vld [vmem:[%s391 + $0xe0] sm:$0xff]
        %v465 = vld [vmem:[%s391 + $0xe8] sm:$0xff]
        %v466 = vld [vmem:[%s391 + $0xf0] sm:$0xff]
        %v467 = vld [vmem:[%s391 + $0xf8] sm:$0xff]
        %v468 = vld [vmem:[%s2] sm:$0x1]
        %470 = vset.pattern.permute.xlu0 0
        %471 = vperm.xlu0 %470, %v436
        %v472 = vpop.permute.xlu0 %471
        %475 = vset.pattern.permute.xlu0 0
        %476 = vperm.xlu0 %475, %v437
        %v477 = vpop.permute.xlu0 %476
        %480 = vset.pattern.permute.xlu0 0
        %481 = vperm.xlu0 %480, %v438
        %v482 = vpop.permute.xlu0 %481
        %485 = vset.pattern.permute.xlu0 0
        %486 = vperm.xlu0 %485, %v439
        %v487 = vpop.permute.xlu0 %486
        %490 = vset.pattern.permute.xlu0 0
        %491 = vperm.xlu0 %490, %v440
        %v492 = vpop.permute.xlu0 %491
        %495 = vset.pattern.permute.xlu0 0
        %496 = vperm.xlu0 %495, %v441
        %v497 = vpop.permute.xlu0 %496
        %500 = vset.pattern.permute.xlu0 0
        %501 = vperm.xlu0 %500, %v442
        %v502 = vpop.permute.xlu0 %501
        %505 = vset.pattern.permute.xlu0 0
        %506 = vperm.xlu0 %505, %v443
        %v507 = vpop.permute.xlu0 %506
        %510 = vset.pattern.permute.xlu0 0
        %511 = vperm.xlu0 %510, %v444
        %v512 = vpop.permute.xlu0 %511
        %515 = vset.pattern.permute.xlu0 0
        %516 = vperm.xlu0 %515, %v445
        %v517 = vpop.permute.xlu0 %516
        %520 = vset.pattern.permute.xlu0 0
        %521 = vperm.xlu0 %520, %v446
        %v522 = vpop.permute.xlu0 %521
        %525 = vset.pattern.permute.xlu0 0
        %526 = vperm.xlu0 %525, %v447
        %v527 = vpop.permute.xlu0 %526
        %530 = vset.pattern.permute.xlu0 0
        %531 = vperm.xlu0 %530, %v448
        %v532 = vpop.permute.xlu0 %531
        %535 = vset.pattern.permute.xlu0 0
        %536 = vperm.xlu0 %535, %v449
        %v537 = vpop.permute.xlu0 %536
        %540 = vset.pattern.permute.xlu0 0
        %541 = vperm.xlu0 %540, %v450
        %v542 = vpop.permute.xlu0 %541
        %545 = vset.pattern.permute.xlu0 0
        %546 = vperm.xlu0 %545, %v451
        %v547 = vpop.permute.xlu0 %546
        %550 = vset.pattern.permute.xlu0 0
        %551 = vperm.xlu0 %550, %v452
        %v552 = vpop.permute.xlu0 %551
        %555 = vset.pattern.permute.xlu0 0
        %556 = vperm.xlu0 %555, %v453
        %v557 = vpop.permute.xlu0 %556
        %560 = vset.pattern.permute.xlu0 0
        %561 = vperm.xlu0 %560, %v454
        %v562 = vpop.permute.xlu0 %561
        %565 = vset.pattern.permute.xlu0 0
        %566 = vperm.xlu0 %565, %v455
        %v567 = vpop.permute.xlu0 %566
        %570 = vset.pattern.permute.xlu0 0
        %571 = vperm.xlu0 %570, %v456
        %v572 = vpop.permute.xlu0 %571
        %575 = vset.pattern.permute.xlu0 0
        %576 = vperm.xlu0 %575, %v457
        %v577 = vpop.permute.xlu0 %576
        %580 = vset.pattern.permute.xlu0 0
        %581 = vperm.xlu0 %580, %v458
        %v582 = vpop.permute.xlu0 %581
        %585 = vset.pattern.permute.xlu0 0
        %586 = vperm.xlu0 %585, %v459
        %v587 = vpop.permute.xlu0 %586
        %590 = vset.pattern.permute.xlu0 0
        %591 = vperm.xlu0 %590, %v460
        %v592 = vpop.permute.xlu0 %591
        %595 = vset.pattern.permute.xlu0 0
        %596 = vperm.xlu0 %595, %v461
        %v597 = vpop.permute.xlu0 %596
        %600 = vset.pattern.permute.xlu0 0
        %601 = vperm.xlu0 %600, %v462
        %v602 = vpop.permute.xlu0 %601
        %605 = vset.pattern.permute.xlu0 0
        %606 = vperm.xlu0 %605, %v463
        %v607 = vpop.permute.xlu0 %606
        %610 = vset.pattern.permute.xlu0 0
        %611 = vperm.xlu0 %610, %v464
        %v612 = vpop.permute.xlu0 %611
        %615 = vset.pattern.permute.xlu0 0
        %616 = vperm.xlu0 %615, %v465
        %v617 = vpop.permute.xlu0 %616
        %620 = vset.pattern.permute.xlu0 0
        %621 = vperm.xlu0 %620, %v466
        %v622 = vpop.permute.xlu0 %621
        %625 = vset.pattern.permute.xlu0 0
        %626 = vperm.xlu0 %625, %v467
        %v627 = vpop.permute.xlu0 %626
        %v630 = vlaneseq
        %v631 = vshrl.u32 %v630, 7
        %v632 = vsub.s32 0, %v631
        %v633 = vrot.slane %v468, %v632
        %v635 = vmul.f32 %v472, %v633
        %v636 = vmul.f32 %v477, %v633
        %v637 = vmul.f32 %v482, %v633
        %v638 = vmul.f32 %v487, %v633
        %v639 = vmul.f32 %v492, %v633
        %v640 = vmul.f32 %v497, %v633
        %v641 = vmul.f32 %v502, %v633
        %v642 = vmul.f32 %v507, %v633
        %v643 = vmul.f32 %v512, %v633
        %v644 = vmul.f32 %v517, %v633
        %v645 = vmul.f32 %v522, %v633
        %v646 = vmul.f32 %v527, %v633
        %v647 = vmul.f32 %v532, %v633
        %v648 = vmul.f32 %v537, %v633
        %v649 = vmul.f32 %v542, %v633
        %v650 = vmul.f32 %v547, %v633
        %v651 = vmul.f32 %v552, %v633
        %v652 = vmul.f32 %v557, %v633
        %v653 = vmul.f32 %v562, %v633
        %v654 = vmul.f32 %v567, %v633
        %v655 = vmul.f32 %v572, %v633
        %v656 = vmul.f32 %v577, %v633
        %v657 = vmul.f32 %v582, %v633
        %v658 = vmul.f32 %v587, %v633
        %v659 = vmul.f32 %v592, %v633
        %v660 = vmul.f32 %v597, %v633
        %v661 = vmul.f32 %v602, %v633
        %v662 = vmul.f32 %v607, %v633
        %v663 = vmul.f32 %v612, %v633
        %v664 = vmul.f32 %v617, %v633
        %v665 = vmul.f32 %v622, %v633
        %v666 = vmul.f32 %v627, %v633
        %v667 = vpack.c.bf16 %v636, %v635
        %v668 = vpack.c.bf16 %v638, %v637
        %v669 = vpack.c.bf16 %v640, %v639
        %v670 = vpack.c.bf16 %v642, %v641
        %v671 = vpack.c.bf16 %v644, %v643
        %v672 = vpack.c.bf16 %v646, %v645
        %v673 = vpack.c.bf16 %v648, %v647
        %v674 = vpack.c.bf16 %v650, %v649
        %v675 = vpack.c.bf16 %v652, %v651
        %v676 = vpack.c.bf16 %v654, %v653
        %v677 = vpack.c.bf16 %v656, %v655
        %v678 = vpack.c.bf16 %v658, %v657
        %v679 = vpack.c.bf16 %v660, %v659
        %v680 = vpack.c.bf16 %v662, %v661
        %v681 = vpack.c.bf16 %v664, %v663
        %v682 = vpack.c.bf16 %v666, %v665
        %v683 = vld [vmem:[#allocation2] sm:$0xff]
        %v684 = vld [vmem:[#allocation2 + $0x8] sm:$0xff]
        %v685 = vld [vmem:[#allocation2 + $0x10] sm:$0xff]
        %v686 = vld [vmem:[#allocation2 + $0x18] sm:$0xff]
        %v687 = vld [vmem:[#allocation2 + $0x20] sm:$0xff]
        %v688 = vld [vmem:[#allocation2 + $0x28] sm:$0xff]
        %v689 = vld [vmem:[#allocation2 + $0x30] sm:$0xff]
        %v690 = vld [vmem:[#allocation2 + $0x38] sm:$0xff]
        %v691 = vld [vmem:[#allocation2 + $0x40] sm:$0xff]
        %v692 = vld [vmem:[#allocation2 + $0x48] sm:$0xff]
        %v693 = vld [vmem:[#allocation2 + $0x50] sm:$0xff]
        %v694 = vld [vmem:[#allocation2 + $0x58] sm:$0xff]
        %v695 = vld [vmem:[#allocation2 + $0x60] sm:$0xff]
        %v696 = vld [vmem:[#allocation2 + $0x68] sm:$0xff]
        %v697 = vld [vmem:[#allocation2 + $0x70] sm:$0xff]
        %v698 = vld [vmem:[#allocation2 + $0x78] sm:$0xff]
        %v699 = vld [vmem:[#allocation2 + $0x80] sm:$0xff]
        %v700 = vld [vmem:[#allocation2 + $0x88] sm:$0xff]
        %v701 = vld [vmem:[#allocation2 + $0x90] sm:$0xff]
        %v702 = vld [vmem:[#allocation2 + $0x98] sm:$0xff]
        %v703 = vld [vmem:[#allocation2 + $0xa0] sm:$0xff]
        %v704 = vld [vmem:[#allocation2 + $0xa8] sm:$0xff]
        %v705 = vld [vmem:[#allocation2 + $0xb0] sm:$0xff]
        %v706 = vld [vmem:[#allocation2 + $0xb8] sm:$0xff]
        %v707 = vld [vmem:[#allocation2 + $0xc0] sm:$0xff]
        %v708 = vld [vmem:[#allocation2 + $0xc8] sm:$0xff]
        %v709 = vld [vmem:[#allocation2 + $0xd0] sm:$0xff]
        %v710 = vld [vmem:[#allocation2 + $0xd8] sm:$0xff]
        %v711 = vld [vmem:[#allocation2 + $0xe0] sm:$0xff]
        %v712 = vld [vmem:[#allocation2 + $0xe8] sm:$0xff]
        %v713 = vld [vmem:[#allocation2 + $0xf0] sm:$0xff]
        %v714 = vld [vmem:[#allocation2 + $0xf8] sm:$0xff]
        %v715 = vld [vmem:[%s357] sm:$0xff]
        %v716 = vld [vmem:[%s357 + $0x8] sm:$0xff]
        %v717 = vld [vmem:[%s357 + $0x10] sm:$0xff]
        %v718 = vld [vmem:[%s357 + $0x18] sm:$0xff]
        %v719 = vld [vmem:[%s357 + $0x20] sm:$0xff]
        %v720 = vld [vmem:[%s357 + $0x28] sm:$0xff]
        %v721 = vld [vmem:[%s357 + $0x30] sm:$0xff]
        %v722 = vld [vmem:[%s357 + $0x38] sm:$0xff]
        %v723 = vld [vmem:[%s357 + $0x40] sm:$0xff]
        %v724 = vld [vmem:[%s357 + $0x48] sm:$0xff]
        %v725 = vld [vmem:[%s357 + $0x50] sm:$0xff]
        %v726 = vld [vmem:[%s357 + $0x58] sm:$0xff]
        %v727 = vld [vmem:[%s357 + $0x60] sm:$0xff]
        %v728 = vld [vmem:[%s357 + $0x68] sm:$0xff]
        %v729 = vld [vmem:[%s357 + $0x70] sm:$0xff]
        %v730 = vld [vmem:[%s357 + $0x78] sm:$0xff]
        %v731 = vld [vmem:[%s357 + $0x80] sm:$0xff]
        %v732 = vld [vmem:[%s357 + $0x88] sm:$0xff]
        %v733 = vld [vmem:[%s357 + $0x90] sm:$0xff]
        %v734 = vld [vmem:[%s357 + $0x98] sm:$0xff]
        %v735 = vld [vmem:[%s357 + $0xa0] sm:$0xff]
        %v736 = vld [vmem:[%s357 + $0xa8] sm:$0xff]
        %v737 = vld [vmem:[%s357 + $0xb0] sm:$0xff]
        %v738 = vld [vmem:[%s357 + $0xb8] sm:$0xff]
        %v739 = vld [vmem:[%s357 + $0xc0] sm:$0xff]
        %v740 = vld [vmem:[%s357 + $0xc8] sm:$0xff]
        %v741 = vld [vmem:[%s357 + $0xd0] sm:$0xff]
        %v742 = vld [vmem:[%s357 + $0xd8] sm:$0xff]
        %v743 = vld [vmem:[%s357 + $0xe0] sm:$0xff]
        %v744 = vld [vmem:[%s357 + $0xe8] sm:$0xff]
        %v745 = vld [vmem:[%s357 + $0xf0] sm:$0xff]
        %v746 = vld [vmem:[%s357 + $0xf8] sm:$0xff]
        %v779 = vunpack.c.l.b16 %v715
        %v780 = vunpack.c.h.b16 %v715
        %v781 = vunpack.c.l.b16 %v716
        %v782 = vunpack.c.h.b16 %v716
        %v783 = vunpack.c.l.b16 %v717
        %v784 = vunpack.c.h.b16 %v717
        %v785 = vunpack.c.l.b16 %v718
        %v786 = vunpack.c.h.b16 %v718
        %v787 = vunpack.c.l.b16 %v719
        %v788 = vunpack.c.h.b16 %v719
        %v789 = vunpack.c.l.b16 %v720
        %v790 = vunpack.c.h.b16 %v720
        %v791 = vunpack.c.l.b16 %v721
        %v792 = vunpack.c.h.b16 %v721
        %v793 = vunpack.c.l.b16 %v722
        %v794 = vunpack.c.h.b16 %v722
        %v795 = vunpack.c.l.b16 %v723
        %v796 = vunpack.c.h.b16 %v723
        %v797 = vunpack.c.l.b16 %v724
        %v798 = vunpack.c.h.b16 %v724
        %v799 = vunpack.c.l.b16 %v725
        %v800 = vunpack.c.h.b16 %v725
        %v801 = vunpack.c.l.b16 %v726
        %v802 = vunpack.c.h.b16 %v726
        %v803 = vunpack.c.l.b16 %v727
        %v804 = vunpack.c.h.b16 %v727
        %v805 = vunpack.c.l.b16 %v728
        %v806 = vunpack.c.h.b16 %v728
        %v807 = vunpack.c.l.b16 %v729
        %v808 = vunpack.c.h.b16 %v729
        %v809 = vunpack.c.l.b16 %v730
        %v810 = vunpack.c.h.b16 %v730
        %v811 = vunpack.c.l.b16 %v731
        %v812 = vunpack.c.h.b16 %v731
        %v813 = vunpack.c.l.b16 %v732
        %v814 = vunpack.c.h.b16 %v732
        %v815 = vunpack.c.l.b16 %v733
        %v816 = vunpack.c.h.b16 %v733
        %v817 = vunpack.c.l.b16 %v734
        %v818 = vunpack.c.h.b16 %v734
        %v819 = vunpack.c.l.b16 %v735
        %v820 = vunpack.c.h.b16 %v735
        %v821 = vunpack.c.l.b16 %v736
        %v822 = vunpack.c.h.b16 %v736
        %v823 = vunpack.c.l.b16 %v737
        %v824 = vunpack.c.h.b16 %v737
        %v825 = vunpack.c.l.b16 %v738
        %v826 = vunpack.c.h.b16 %v738
        %v827 = vunpack.c.l.b16 %v739
        %v828 = vunpack.c.h.b16 %v739
        %v829 = vunpack.c.l.b16 %v740
        %v830 = vunpack.c.h.b16 %v740
        %v831 = vunpack.c.l.b16 %v741
        %v832 = vunpack.c.h.b16 %v741
        %v833 = vunpack.c.l.b16 %v742
        %v834 = vunpack.c.h.b16 %v742
        %v835 = vunpack.c.l.b16 %v743
        %v836 = vunpack.c.h.b16 %v743
        %v837 = vunpack.c.l.b16 %v744
        %v838 = vunpack.c.h.b16 %v744
        %v839 = vunpack.c.l.b16 %v745
        %v840 = vunpack.c.h.b16 %v745
        %v841 = vunpack.c.l.b16 %v746
        %v842 = vunpack.c.h.b16 %v746
        %v843 = vpack.c.b16 %v781, %v779
        %v844 = vpack.c.b16 %v782, %v780
        %v845 = vpack.c.b16 %v785, %v783
        %v846 = vpack.c.b16 %v786, %v784
        %v847 = vpack.c.b16 %v789, %v787
        %v848 = vpack.c.b16 %v790, %v788
        %v849 = vpack.c.b16 %v793, %v791
        %v850 = vpack.c.b16 %v794, %v792
        %v851 = vpack.c.b16 %v797, %v795
        %v852 = vpack.c.b16 %v798, %v796
        %v853 = vpack.c.b16 %v801, %v799
        %v854 = vpack.c.b16 %v802, %v800
        %v855 = vpack.c.b16 %v805, %v803
        %v856 = vpack.c.b16 %v806, %v804
        %v857 = vpack.c.b16 %v809, %v807
        %v858 = vpack.c.b16 %v810, %v808
        %v859 = vpack.c.b16 %v813, %v811
        %v860 = vpack.c.b16 %v814, %v812
        %v861 = vpack.c.b16 %v817, %v815
        %v862 = vpack.c.b16 %v818, %v816
        %v863 = vpack.c.b16 %v821, %v819
        %v864 = vpack.c.b16 %v822, %v820
        %v865 = vpack.c.b16 %v825, %v823
        %v866 = vpack.c.b16 %v826, %v824
        %v867 = vpack.c.b16 %v829, %v827
        %v868 = vpack.c.b16 %v830, %v828
        %v869 = vpack.c.b16 %v833, %v831
        %v870 = vpack.c.b16 %v834, %v832
        %v871 = vpack.c.b16 %v837, %v835
        %v872 = vpack.c.b16 %v838, %v836
        %v873 = vpack.c.b16 %v841, %v839
        %v874 = vpack.c.b16 %v842, %v840
        %907 = vmatprep.subr.bf16.mxu0 0
        %908 = vmatpush1.bf16.msra.mxu0 %v667
        %909 = vmatprep.subr.bf16.mxu0 0
        %910 = vmatpush1.bf16.msra.mxu0 %v668
        %911 = vmatprep.subr.bf16.mxu0 0
        %912 = vmatpush1.bf16.msra.mxu0 %v669
        %913 = vmatprep.subr.bf16.mxu0 0
        %914 = vmatpush1.bf16.msra.mxu0 %v670
        %915 = vmatprep.subr.bf16.mxu0 0
        %916 = vmatpush1.bf16.msra.mxu0 %v671
        %917 = vmatprep.subr.bf16.mxu0 0
        %918 = vmatpush1.bf16.msra.mxu0 %v672
        %919 = vmatprep.subr.bf16.mxu0 0
        %920 = vmatpush1.bf16.msra.mxu0 %v673
        %921 = vmatprep.subr.bf16.mxu0 0
        %922 = vmatpush1.bf16.msra.mxu0 %v674
        %923 = vmatprep.subr.bf16.mxu0 0
        %924 = vmatpush1.bf16.msra.mxu0 %v675
        %925 = vmatprep.subr.bf16.mxu0 0
        %926 = vmatpush1.bf16.msra.mxu0 %v676
        %927 = vmatprep.subr.bf16.mxu0 0
        %928 = vmatpush1.bf16.msra.mxu0 %v677
        %929 = vmatprep.subr.bf16.mxu0 0
        %930 = vmatpush1.bf16.msra.mxu0 %v678
        %931 = vmatprep.subr.bf16.mxu0 0
        %932 = vmatpush1.bf16.msra.mxu0 %v679
        %933 = vmatprep.subr.bf16.mxu0 0
        %934 = vmatpush1.bf16.msra.mxu0 %v680
        %935 = vmatprep.subr.bf16.mxu0 0
        %936 = vmatpush1.bf16.msra.mxu0 %v681
        %937 = vmatprep.subr.bf16.mxu0 0
        %938 = vmatpush1.bf16.msra.mxu0 %v682
        %939 = vmatprep.mubr.bf16.mxu0 %v844
        %940 = vmatmul.mubr.bf16.gmra.mrb[0].mxu0 %v843
        %v941 = vpop.f32.mrb[0].mxu0
        %v942 = vadd.f32 0.0, %v941
        %v943 = vpop.f32.mrb[0].mxu0
        %v944 = vpop.f32.mrb[0].mxu0
        %v945 = vadd.f32 0.0, %v944
        %v946 = vpop.f32.mrb[0].mxu0
        %947 = vmatprep.mubr.bf16.mxu0 %v846
        %948 = vmatmul.mubr.bf16.gmra.mrb[0].mxu0 %v845
        %v949 = vpop.f32.mrb[0].mxu0
        %v950 = vadd.f32 0.0, %v949
        %v951 = vpop.f32.mrb[0].mxu0
        %v952 = vpop.f32.mrb[0].mxu0
        %v953 = vadd.f32 0.0, %v952
        %v954 = vpop.f32.mrb[0].mxu0
        %955 = vmatprep.mubr.bf16.mxu0 %v848
        %956 = vmatmul.mubr.bf16.gmra.mrb[0].mxu0 %v847
        %v957 = vpop.f32.mrb[0].mxu0
        %v958 = vadd.f32 0.0, %v957
        %v959 = vpop.f32.mrb[0].mxu0
        %v960 = vpop.f32.mrb[0].mxu0
        %v961 = vadd.f32 0.0, %v960
        %v962 = vpop.f32.mrb[0].mxu0
        %963 = vmatprep.mubr.bf16.mxu0 %v850
        %964 = vmatmul.mubr.bf16.gmra.mrb[0].mxu0 %v849
        %v965 = vpop.f32.mrb[0].mxu0
        %v966 = vadd.f32 0.0, %v965
        %v967 = vpop.f32.mrb[0].mxu0
        %v968 = vpop.f32.mrb[0].mxu0
        %v969 = vadd.f32 0.0, %v968
        %v970 = vpop.f32.mrb[0].mxu0
        %971 = vmatprep.mubr.bf16.mxu0 %v852
        %972 = vmatmul.mubr.bf16.gmra.mrb[0].mxu0 %v851
        %v973 = vpop.f32.mrb[0].mxu0
        %v974 = vadd.f32 0.0, %v973
        %v975 = vpop.f32.mrb[0].mxu0
        %v976 = vpop.f32.mrb[0].mxu0
        %v977 = vadd.f32 0.0, %v976
        %v978 = vpop.f32.mrb[0].mxu0
        %979 = vmatprep.mubr.bf16.mxu0 %v854
        %980 = vmatmul.mubr.bf16.gmra.mrb[0].mxu0 %v853
        %v981 = vpop.f32.mrb[0].mxu0
        %v982 = vadd.f32 0.0, %v981
        %v983 = vpop.f32.mrb[0].mxu0
        %v984 = vpop.f32.mrb[0].mxu0
        %v985 = vadd.f32 0.0, %v984
        %v986 = vpop.f32.mrb[0].mxu0
        %987 = vmatprep.mubr.bf16.mxu0 %v856
        %988 = vmatmul.mubr.bf16.gmra.mrb[0].mxu0 %v855
        %v989 = vpop.f32.mrb[0].mxu0
        %v990 = vadd.f32 0.0, %v989
        %v991 = vpop.f32.mrb[0].mxu0
        %v992 = vpop.f32.mrb[0].mxu0
        %v993 = vadd.f32 0.0, %v992
        %v994 = vpop.f32.mrb[0].mxu0
        %995 = vmatprep.mubr.bf16.mxu0 %v858
        %996 = vmatmul.mubr.bf16.gmra.mrb[0].mxu0 %v857
        %v997 = vpop.f32.mrb[0].mxu0
        %v998 = vadd.f32 0.0, %v997
        %v999 = vpop.f32.mrb[0].mxu0
        %v1000 = vpop.f32.mrb[0].mxu0
        %v1001 = vadd.f32 0.0, %v1000
        %v1002 = vpop.f32.mrb[0].mxu0
        %1003 = vmatprep.mubr.bf16.mxu0 %v860
        %1004 = vmatmul.mubr.bf16.gmra.mrb[0].mxu0 %v859
        %v1005 = vpop.f32.mrb[0].mxu0
        %v1006 = vadd.f32 0.0, %v1005
        %v1007 = vpop.f32.mrb[0].mxu0
        %v1008 = vpop.f32.mrb[0].mxu0
        %v1009 = vadd.f32 0.0, %v1008
        %v1010 = vpop.f32.mrb[0].mxu0
        %1011 = vmatprep.mubr.bf16.mxu0 %v862
        %1012 = vmatmul.mubr.bf16.gmra.mrb[0].mxu0 %v861
        %v1013 = vpop.f32.mrb[0].mxu0
        %v1014 = vadd.f32 0.0, %v1013
        %v1015 = vpop.f32.mrb[0].mxu0
        %v1016 = vpop.f32.mrb[0].mxu0
        %v1017 = vadd.f32 0.0, %v1016
        %v1018 = vpop.f32.mrb[0].mxu0
        %1019 = vmatprep.mubr.bf16.mxu0 %v864
        %1020 = vmatmul.mubr.bf16.gmra.mrb[0].mxu0 %v863
        %v1021 = vpop.f32.mrb[0].mxu0
        %v1022 = vadd.f32 0.0, %v1021
        %v1023 = vpop.f32.mrb[0].mxu0
        %v1024 = vpop.f32.mrb[0].mxu0
        %v1025 = vadd.f32 0.0, %v1024
        %v1026 = vpop.f32.mrb[0].mxu0
        %1027 = vmatprep.mubr.bf16.mxu0 %v866
        %1028 = vmatmul.mubr.bf16.gmra.mrb[0].mxu0 %v865
        %v1029 = vpop.f32.mrb[0].mxu0
        %v1030 = vadd.f32 0.0, %v1029
        %v1031 = vpop.f32.mrb[0].mxu0
        %v1032 = vpop.f32.mrb[0].mxu0
        %v1033 = vadd.f32 0.0, %v1032
        %v1034 = vpop.f32.mrb[0].mxu0
        %1035 = vmatprep.mubr.bf16.mxu0 %v868
        %1036 = vmatmul.mubr.bf16.gmra.mrb[0].mxu0 %v867
        %v1037 = vpop.f32.mrb[0].mxu0
        %v1038 = vadd.f32 0.0, %v1037
        %v1039 = vpop.f32.mrb[0].mxu0
        %v1040 = vpop.f32.mrb[0].mxu0
        %v1041 = vadd.f32 0.0, %v1040
        %v1042 = vpop.f32.mrb[0].mxu0
        %1043 = vmatprep.mubr.bf16.mxu0 %v870
        %1044 = vmatmul.mubr.bf16.gmra.mrb[0].mxu0 %v869
        %v1045 = vpop.f32.mrb[0].mxu0
        %v1046 = vadd.f32 0.0, %v1045
        %v1047 = vpop.f32.mrb[0].mxu0
        %v1048 = vpop.f32.mrb[0].mxu0
        %v1049 = vadd.f32 0.0, %v1048
        %v1050 = vpop.f32.mrb[0].mxu0
        %1051 = vmatprep.mubr.bf16.mxu0 %v872
        %1052 = vmatmul.mubr.bf16.gmra.mrb[0].mxu0 %v871
        %v1053 = vpop.f32.mrb[0].mxu0
        %v1054 = vadd.f32 0.0, %v1053
        %v1055 = vpop.f32.mrb[0].mxu0
        %v1056 = vpop.f32.mrb[0].mxu0
        %v1057 = vadd.f32 0.0, %v1056
        %v1058 = vpop.f32.mrb[0].mxu0
        %1059 = vmatprep.mubr.bf16.mxu0 %v874
        %1060 = vmatmul.mubr.bf16.gmra.mrb[0].mxu0 %v873
        %v1061 = vpop.f32.mrb[0].mxu0
        %v1062 = vadd.f32 0.0, %v1061
        %v1063 = vpop.f32.mrb[0].mxu0
        %v1064 = vpop.f32.mrb[0].mxu0
        %v1065 = vadd.f32 0.0, %v1064
        %v1066 = vpop.f32.mrb[0].mxu0
        %1067 = vdwg.mxu0
        %v1068 = vadd.f32 %v683, %v942
        %v1069 = vadd.f32 %v684, %v945
        %v1070 = vadd.f32 %v685, %v950
        %v1071 = vadd.f32 %v686, %v953
        %v1072 = vadd.f32 %v687, %v958
        %v1073 = vadd.f32 %v688, %v961
        %v1074 = vadd.f32 %v689, %v966
        %v1075 = vadd.f32 %v690, %v969
        %v1076 = vadd.f32 %v691, %v974
        %v1077 = vadd.f32 %v692, %v977
        %v1078 = vadd.f32 %v693, %v982
        %v1079 = vadd.f32 %v694, %v985
        %v1080 = vadd.f32 %v695, %v990
        %v1081 = vadd.f32 %v696, %v993
        %v1082 = vadd.f32 %v697, %v998
        %v1083 = vadd.f32 %v698, %v1001
        %v1084 = vadd.f32 %v699, %v1006
        %v1085 = vadd.f32 %v700, %v1009
        %v1086 = vadd.f32 %v701, %v1014
        %v1087 = vadd.f32 %v702, %v1017
        %v1088 = vadd.f32 %v703, %v1022
        %v1089 = vadd.f32 %v704, %v1025
        %v1090 = vadd.f32 %v705, %v1030
        %v1091 = vadd.f32 %v706, %v1033
        %v1092 = vadd.f32 %v707, %v1038
        %v1093 = vadd.f32 %v708, %v1041
        %v1094 = vadd.f32 %v709, %v1046
        %v1095 = vadd.f32 %v710, %v1049
        %v1096 = vadd.f32 %v711, %v1054
        %v1097 = vadd.f32 %v712, %v1057
        %v1098 = vadd.f32 %v713, %v1062
        %v1099 = vadd.f32 %v714, %v1065
        %1100 = vst [vmem:[#allocation2] sm:$0xff] %v1068
        %1101 = vst [vmem:[#allocation2 + $0x8] sm:$0xff] %v1069
        %1102 = vst [vmem:[#allocation2 + $0x10] sm:$0xff] %v1070
        %1103 = vst [vmem:[#allocation2 + $0x18] sm:$0xff] %v1071
        %1104 = vst [vmem:[#allocation2 + $0x20] sm:$0xff] %v1072
        %1105 = vst [vmem:[#allocation2 + $0x28] sm:$0xff] %v1073
        %1106 = vst [vmem:[#allocation2 + $0x30] sm:$0xff] %v1074
        %1107 = vst [vmem:[#allocation2 + $0x38] sm:$0xff] %v1075
        %1108 = vst [vmem:[#allocation2 + $0x40] sm:$0xff] %v1076
        %1109 = vst [vmem:[#allocation2 + $0x48] sm:$0xff] %v1077
        %1110 = vst [vmem:[#allocation2 + $0x50] sm:$0xff] %v1078
        %1111 = vst [vmem:[#allocation2 + $0x58] sm:$0xff] %v1079
        %1112 = vst [vmem:[#allocation2 + $0x60] sm:$0xff] %v1080
        %1113 = vst [vmem:[#allocation2 + $0x68] sm:$0xff] %v1081
        %1114 = vst [vmem:[#allocation2 + $0x70] sm:$0xff] %v1082
        %1115 = vst [vmem:[#allocation2 + $0x78] sm:$0xff] %v1083
        %1116 = vst [vmem:[#allocation2 + $0x80] sm:$0xff] %v1084
        %1117 = vst [vmem:[#allocation2 + $0x88] sm:$0xff] %v1085
        %1118 = vst [vmem:[#allocation2 + $0x90] sm:$0xff] %v1086
        %1119 = vst [vmem:[#allocation2 + $0x98] sm:$0xff] %v1087
        %1120 = vst [vmem:[#allocation2 + $0xa0] sm:$0xff] %v1088
        %1121 = vst [vmem:[#allocation2 + $0xa8] sm:$0xff] %v1089
        %1122 = vst [vmem:[#allocation2 + $0xb0] sm:$0xff] %v1090
        %1123 = vst [vmem:[#allocation2 + $0xb8] sm:$0xff] %v1091
        %1124 = vst [vmem:[#allocation2 + $0xc0] sm:$0xff] %v1092
        %1125 = vst [vmem:[#allocation2 + $0xc8] sm:$0xff] %v1093
        %1126 = vst [vmem:[#allocation2 + $0xd0] sm:$0xff] %v1094
        %1127 = vst [vmem:[#allocation2 + $0xd8] sm:$0xff] %v1095
        %1128 = vst [vmem:[#allocation2 + $0xe0] sm:$0xff] %v1096
        %1129 = vst [vmem:[#allocation2 + $0xe8] sm:$0xff] %v1097
        %1130 = vst [vmem:[#allocation2 + $0xf0] sm:$0xff] %v1098
        %1131 = vst [vmem:[#allocation2 + $0xf8] sm:$0xff] %v1099
        %p1132 = scmp.eq.s32.totalorder %s20, 1
        // Predicated region
        $region79: #{gnn_forward.2} parent=69 // pred_check
          %p1133 = pneg %p1132
        $region80: #{gnn_forward.2} parent=69 // pred_check_branch
          %1135 = sbr.rel (%p1133) target = $region82
        $region81: #{gnn_forward.2} parent=69 // pred_region
          %v1136 = vld [vmem:[#allocation2] sm:$0xff]
          %v1137 = vld [vmem:[#allocation2 + $0x8] sm:$0xff]
          %v1138 = vld [vmem:[#allocation2 + $0x10] sm:$0xff]
          %v1139 = vld [vmem:[#allocation2 + $0x18] sm:$0xff]
          %v1140 = vld [vmem:[#allocation2 + $0x20] sm:$0xff]
          %v1141 = vld [vmem:[#allocation2 + $0x28] sm:$0xff]
          %v1142 = vld [vmem:[#allocation2 + $0x30] sm:$0xff]
          %v1143 = vld [vmem:[#allocation2 + $0x38] sm:$0xff]
          %v1144 = vld [vmem:[#allocation2 + $0x40] sm:$0xff]
          %v1145 = vld [vmem:[#allocation2 + $0x48] sm:$0xff]
          %v1146 = vld [vmem:[#allocation2 + $0x50] sm:$0xff]
          %v1147 = vld [vmem:[#allocation2 + $0x58] sm:$0xff]
          %v1148 = vld [vmem:[#allocation2 + $0x60] sm:$0xff]
          %v1149 = vld [vmem:[#allocation2 + $0x68] sm:$0xff]
          %v1150 = vld [vmem:[#allocation2 + $0x70] sm:$0xff]
          %v1151 = vld [vmem:[#allocation2 + $0x78] sm:$0xff]
          %v1152 = vld [vmem:[#allocation2 + $0x80] sm:$0xff]
          %v1153 = vld [vmem:[#allocation2 + $0x88] sm:$0xff]
          %v1154 = vld [vmem:[#allocation2 + $0x90] sm:$0xff]
          %v1155 = vld [vmem:[#allocation2 + $0x98] sm:$0xff]
          %v1156 = vld [vmem:[#allocation2 + $0xa0] sm:$0xff]
          %v1157 = vld [vmem:[#allocation2 + $0xa8] sm:$0xff]
          %v1158 = vld [vmem:[#allocation2 + $0xb0] sm:$0xff]
          %v1159 = vld [vmem:[#allocation2 + $0xb8] sm:$0xff]
          %v1160 = vld [vmem:[#allocation2 + $0xc0] sm:$0xff]
          %v1161 = vld [vmem:[#allocation2 + $0xc8] sm:$0xff]
          %v1162 = vld [vmem:[#allocation2 + $0xd0] sm:$0xff]
          %v1163 = vld [vmem:[#allocation2 + $0xd8] sm:$0xff]
          %v1164 = vld [vmem:[#allocation2 + $0xe0] sm:$0xff]
          %v1165 = vld [vmem:[#allocation2 + $0xe8] sm:$0xff]
          %v1166 = vld [vmem:[#allocation2 + $0xf0] sm:$0xff]
          %v1167 = vld [vmem:[#allocation2 + $0xf8] sm:$0xff]
          %v1168 = vld [vmem:[%s3] sm:$0x1]
          %v1170 = vlaneseq
          %v1171 = vshrl.u32 %v1170, 7
          %v1172 = vsub.s32 0, %v1171
          %v1173 = vrot.slane %v1168, %v1172
          %v1175 = vadd.f32 %v1136, %v1173
          %v1176 = vadd.f32 %v1137, %v1173
          %v1177 = vadd.f32 %v1138, %v1173
          %v1178 = vadd.f32 %v1139, %v1173
          %v1179 = vadd.f32 %v1140, %v1173
          %v1180 = vadd.f32 %v1141, %v1173
          %v1181 = vadd.f32 %v1142, %v1173
          %v1182 = vadd.f32 %v1143, %v1173
          %v1183 = vadd.f32 %v1144, %v1173
          %v1184 = vadd.f32 %v1145, %v1173
          %v1185 = vadd.f32 %v1146, %v1173
          %v1186 = vadd.f32 %v1147, %v1173
          %v1187 = vadd.f32 %v1148, %v1173
          %v1188 = vadd.f32 %v1149, %v1173
          %v1189 = vadd.f32 %v1150, %v1173
          %v1190 = vadd.f32 %v1151, %v1173
          %v1191 = vadd.f32 %v1152, %v1173
          %v1192 = vadd.f32 %v1153, %v1173
          %v1193 = vadd.f32 %v1154, %v1173
          %v1194 = vadd.f32 %v1155, %v1173
          %v1195 = vadd.f32 %v1156, %v1173
          %v1196 = vadd.f32 %v1157, %v1173
          %v1197 = vadd.f32 %v1158, %v1173
          %v1198 = vadd.f32 %v1159, %v1173
          %v1199 = vadd.f32 %v1160, %v1173
          %v1200 = vadd.f32 %v1161, %v1173
          %v1201 = vadd.f32 %v1162, %v1173
          %v1202 = vadd.f32 %v1163, %v1173
          %v1203 = vadd.f32 %v1164, %v1173
          %v1204 = vadd.f32 %v1165, %v1173
          %v1205 = vadd.f32 %v1166, %v1173
          %v1206 = vadd.f32 %v1167, %v1173
          %v1207 = vmax.f32 %v1175, 0.0
          %v1208 = vmax.f32 %v1176, 0.0
          %v1209 = vmax.f32 %v1177, 0.0
          %v1210 = vmax.f32 %v1178, 0.0
          %v1211 = vmax.f32 %v1179, 0.0
          %v1212 = vmax.f32 %v1180, 0.0
          %v1213 = vmax.f32 %v1181, 0.0
          %v1214 = vmax.f32 %v1182, 0.0
          %v1215 = vmax.f32 %v1183, 0.0
          %v1216 = vmax.f32 %v1184, 0.0
          %v1217 = vmax.f32 %v1185, 0.0
          %v1218 = vmax.f32 %v1186, 0.0
          %v1219 = vmax.f32 %v1187, 0.0
          %v1220 = vmax.f32 %v1188, 0.0
          %v1221 = vmax.f32 %v1189, 0.0
          %v1222 = vmax.f32 %v1190, 0.0
          %v1223 = vmax.f32 %v1191, 0.0
          %v1224 = vmax.f32 %v1192, 0.0
          %v1225 = vmax.f32 %v1193, 0.0
          %v1226 = vmax.f32 %v1194, 0.0
          %v1227 = vmax.f32 %v1195, 0.0
          %v1228 = vmax.f32 %v1196, 0.0
          %v1229 = vmax.f32 %v1197, 0.0
          %v1230 = vmax.f32 %v1198, 0.0
          %v1231 = vmax.f32 %v1199, 0.0
          %v1232 = vmax.f32 %v1200, 0.0
          %v1233 = vmax.f32 %v1201, 0.0
          %v1234 = vmax.f32 %v1202, 0.0
          %v1235 = vmax.f32 %v1203, 0.0
          %v1236 = vmax.f32 %v1204, 0.0
          %v1237 = vmax.f32 %v1205, 0.0
          %v1238 = vmax.f32 %v1206, 0.0
          %v1239 = vpack.c.bf16 %v1208, %v1207
          %v1240 = vpack.c.bf16 %v1210, %v1209
          %v1241 = vpack.c.bf16 %v1212, %v1211
          %v1242 = vpack.c.bf16 %v1214, %v1213
          %v1243 = vpack.c.bf16 %v1216, %v1215
          %v1244 = vpack.c.bf16 %v1218, %v1217
          %v1245 = vpack.c.bf16 %v1220, %v1219
          %v1246 = vpack.c.bf16 %v1222, %v1221
          %v1247 = vpack.c.bf16 %v1224, %v1223
          %v1248 = vpack.c.bf16 %v1226, %v1225
          %v1249 = vpack.c.bf16 %v1228, %v1227
          %v1250 = vpack.c.bf16 %v1230, %v1229
          %v1251 = vpack.c.bf16 %v1232, %v1231
          %v1252 = vpack.c.bf16 %v1234, %v1233
          %v1253 = vpack.c.bf16 %v1236, %v1235
          %v1254 = vpack.c.bf16 %v1238, %v1237
          %v1271 = vunpack.c.l.b16 %v1239
          %v1272 = vunpack.c.h.b16 %v1239
          %v1273 = vunpack.c.l.b16 %v1240
          %v1274 = vunpack.c.h.b16 %v1240
          %v1275 = vunpack.c.l.b16 %v1241
          %v1276 = vunpack.c.h.b16 %v1241
          %v1277 = vunpack.c.l.b16 %v1242
          %v1278 = vunpack.c.h.b16 %v1242
          %v1279 = vunpack.c.l.b16 %v1243
          %v1280 = vunpack.c.h.b16 %v1243
          %v1281 = vunpack.c.l.b16 %v1244
          %v1282 = vunpack.c.h.b16 %v1244
          %v1283 = vunpack.c.l.b16 %v1245
          %v1284 = vunpack.c.h.b16 %v1245
          %v1285 = vunpack.c.l.b16 %v1246
          %v1286 = vunpack.c.h.b16 %v1246
          %v1287 = vunpack.c.l.b16 %v1247
          %v1288 = vunpack.c.h.b16 %v1247
          %v1289 = vunpack.c.l.b16 %v1248
          %v1290 = vunpack.c.h.b16 %v1248
          %v1291 = vunpack.c.l.b16 %v1249
          %v1292 = vunpack.c.h.b16 %v1249
          %v1293 = vunpack.c.l.b16 %v1250
          %v1294 = vunpack.c.h.b16 %v1250
          %v1295 = vunpack.c.l.b16 %v1251
          %v1296 = vunpack.c.h.b16 %v1251
          %v1297 = vunpack.c.l.b16 %v1252
          %v1298 = vunpack.c.h.b16 %v1252
          %v1299 = vunpack.c.l.b16 %v1253
          %v1300 = vunpack.c.h.b16 %v1253
          %v1301 = vunpack.c.l.b16 %v1254
          %v1302 = vunpack.c.h.b16 %v1254
          %v1303 = vpack.c.b16 %v1271, %v1271
          %v1304 = vpack.c.b16 %v1272, %v1272
          %v1305 = vpack.c.b16 %v1273, %v1273
          %v1306 = vpack.c.b16 %v1274, %v1274
          %v1307 = vpack.c.b16 %v1275, %v1275
          %v1308 = vpack.c.b16 %v1276, %v1276
          %v1309 = vpack.c.b16 %v1277, %v1277
          %v1310 = vpack.c.b16 %v1278, %v1278
          %v1311 = vpack.c.b16 %v1279, %v1279
          %v1312 = vpack.c.b16 %v1280, %v1280
          %v1313 = vpack.c.b16 %v1281, %v1281
          %v1314 = vpack.c.b16 %v1282, %v1282
          %v1315 = vpack.c.b16 %v1283, %v1283
          %v1316 = vpack.c.b16 %v1284, %v1284
          %v1317 = vpack.c.b16 %v1285, %v1285
          %v1318 = vpack.c.b16 %v1286, %v1286
          %v1319 = vpack.c.b16 %v1287, %v1287
          %v1320 = vpack.c.b16 %v1288, %v1288
          %v1321 = vpack.c.b16 %v1289, %v1289
          %v1322 = vpack.c.b16 %v1290, %v1290
          %v1323 = vpack.c.b16 %v1291, %v1291
          %v1324 = vpack.c.b16 %v1292, %v1292
          %v1325 = vpack.c.b16 %v1293, %v1293
          %v1326 = vpack.c.b16 %v1294, %v1294
          %v1327 = vpack.c.b16 %v1295, %v1295
          %v1328 = vpack.c.b16 %v1296, %v1296
          %v1329 = vpack.c.b16 %v1297, %v1297
          %v1330 = vpack.c.b16 %v1298, %v1298
          %v1331 = vpack.c.b16 %v1299, %v1299
          %v1332 = vpack.c.b16 %v1300, %v1300
          %v1333 = vpack.c.b16 %v1301, %v1301
          %v1334 = vpack.c.b16 %v1302, %v1302
          %1367 = vst [vmem:[%s397] sm:$0xf] %v1303
          %1368 = vst [vmem:[%s397 + $0x4] sm:$0xf] %v1304
          %1369 = vst [vmem:[%s397 + $0x8] sm:$0xf] %v1305
          %1370 = vst [vmem:[%s397 + $0xc] sm:$0xf] %v1306
          %1371 = vst [vmem:[%s397 + $0x10] sm:$0xf] %v1307
          %1372 = vst [vmem:[%s397 + $0x14] sm:$0xf] %v1308
          %1373 = vst [vmem:[%s397 + $0x18] sm:$0xf] %v1309
          %1374 = vst [vmem:[%s397 + $0x1c] sm:$0xf] %v1310
          %1375 = vst [vmem:[%s397 + $0x20] sm:$0xf] %v1311
          %1376 = vst [vmem:[%s397 + $0x24] sm:$0xf] %v1312
          %1377 = vst [vmem:[%s397 + $0x28] sm:$0xf] %v1313
          %1378 = vst [vmem:[%s397 + $0x2c] sm:$0xf] %v1314
          %1379 = vst [vmem:[%s397 + $0x30] sm:$0xf] %v1315
          %1380 = vst [vmem:[%s397 + $0x34] sm:$0xf] %v1316
          %1381 = vst [vmem:[%s397 + $0x38] sm:$0xf] %v1317
          %1382 = vst [vmem:[%s397 + $0x3c] sm:$0xf] %v1318
          %1383 = vst [vmem:[%s397 + $0x40] sm:$0xf] %v1319
          %1384 = vst [vmem:[%s397 + $0x44] sm:$0xf] %v1320
          %1385 = vst [vmem:[%s397 + $0x48] sm:$0xf] %v1321
          %1386 = vst [vmem:[%s397 + $0x4c] sm:$0xf] %v1322
          %1387 = vst [vmem:[%s397 + $0x50] sm:$0xf] %v1323
          %1388 = vst [vmem:[%s397 + $0x54] sm:$0xf] %v1324
          %1389 = vst [vmem:[%s397 + $0x58] sm:$0xf] %v1325
          %1390 = vst [vmem:[%s397 + $0x5c] sm:$0xf] %v1326
          %1391 = vst [vmem:[%s397 + $0x60] sm:$0xf] %v1327
          %1392 = vst [vmem:[%s397 + $0x64] sm:$0xf] %v1328
          %1393 = vst [vmem:[%s397 + $0x68] sm:$0xf] %v1329
          %1394 = vst [vmem:[%s397 + $0x6c] sm:$0xf] %v1330
          %1395 = vst [vmem:[%s397 + $0x70] sm:$0xf] %v1331
          %1396 = vst [vmem:[%s397 + $0x74] sm:$0xf] %v1332
          %1397 = vst [vmem:[%s397 + $0x78] sm:$0xf] %v1333
          %1398 = vst [vmem:[%s397 + $0x7c] sm:$0xf] %v1334
        $region82: #{gnn_forward.2} parent=69 // pred_fallthru
          _
        %s1399 = smul.u32 32, %s19
        %p1400 = scmp.lt.s32.totalorder %s1399, 63
        %s1401 = scalar_select %p1400, %s1399, 63
        %s1402 = smul.addr %s1401, 4
        %s1403 = scalar_lea.vmem %s4, %s1402
        // Predicated region
        $region83: #{gnn_forward.2} parent=69 // pred_check
          %p1404 = pneg %p141
        $region84: #{gnn_forward.2} parent=69 // pred_check_branch
          %1406 = sbr.rel (%p1404) target = $region86
        $region85: #{gnn_forward.2} parent=69 // pred_region
          %s1407 = smul.u32 32, %s19
        $region86: #{gnn_forward.2} parent=69 // pred_fallthru
          _
      $region70: #{gnn_forward.2} parent=5 // pred_fallthru
        _
      %p1408 = scmp.le.s32.totalorder 2, %s10
      // Predicated region
      $region87: #{gnn_forward.2} parent=5 // pred_check
        %p1409 = pneg %p1408
      $region88: #{gnn_forward.2} parent=5 // pred_check_branch
        %1411 = sbr.rel (%p1409) target = $region90
      $region89: #{gnn_forward.2} parent=5 // pred_region
        %s1412 = ssub.s32 %s10, 2
        // Predicated region
        $region91: #{gnn_forward.2} parent=89 // pred_check
          %p1413 = pneg %p147
        $region92: #{gnn_forward.2} parent=89 // pred_check_branch
          %1415 = sbr.rel (%p1413) target = $region94
        $region93: #{gnn_forward.2} parent=89 // pred_region
          %s1416 = smul.u32 32, %s21
          %p1417 = scmp.lt.s32.totalorder %s1416, 63
          %s1418 = scalar_select %p1417, %s1416, 63
          %s1419 = smul.addr %s1418, 4
          %s1420 = scalar_lea.vmem %s4, %s1419
        $region94: #{gnn_forward.2} parent=89 // pred_fallthru
          _
      $region90: #{gnn_forward.2} parent=5 // pred_fallthru
        _
    $region6: #{gnn_forward.2} parent=1 // loop_footer
      %s14 = sadd.s32 1, %s10
    $region7: #{gnn_forward.2} parent=1 // loop_footer_branch
      %9 = sbr.rel target = $region3
    $region8: #{gnn_forward.2} parent=1 // loop_exit
      _

</llo_original>
